<compile_context>
chip_gen: v5e
topology: v5e:2x2
jax: 0.10.0
libtpu: 0.0.40
codegen_flags: <defaults>
</compile_context>

<pallas_src>
import functools

import numpy as np
import jax
import jax.numpy as jnp
from jax.experimental import pallas as pl
from jax.experimental.pallas import tpu as pltpu

NEG_SLOPE = 0.2   # nn.LeakyReLU(negative_slope=0.2)
BN_EPS = 1e-5     # nn.BatchNorm2d default eps
LANE = 128        # TPU lane width: channel axes are padded to this


def _cdiv(a, b):
    return -(-a // b)


def _out_size(size, k, s, p):
    return (size + 2 * p - k) // s + 1


def _lrelu(x):
    return jnp.where(x > 0, x, NEG_SLOPE * x)


# ---------------------------------------------------------------------------
# Host-built constant: one-hot row-gather per conv2 tap (zero rows = padding).
# ---------------------------------------------------------------------------

def _build_gather_conv2(n, oh1, ow1, oh2, ow2, k, s, p):
    """(K*K, M2, M1): t[k, m2, m1] = 1 iff conv2 output m2, tap k reads y1 row m1."""
    m1 = n * oh1 * ow1
    m2 = n * oh2 * ow2
    t = np.zeros((k * k, m2, m1), np.float32)
    for i in range(k):
        for j in range(k):
            kk = i * k + j
            for nn in range(n):
                for y in range(oh2):
                    for x in range(ow2):
                        hh = s * y + i - p
                        ww = s * x + j - p
                        if 0 <= hh < oh1 and 0 <= ww < ow1:
                            t[kk, (nn * oh2 + y) * ow2 + x,
                              (nn * oh1 + hh) * ow1 + ww] = 1.0
    return t


# ---------------------------------------------------------------------------
# The single fused Pallas kernel (everything resident in VMEM, no grid).
# ---------------------------------------------------------------------------

def _fused_input_kernel(x_ref, w1_ref, t2_ref, w2_ref, gb_ref, o_ref,
                        *, n_k2, m2, f, f_pad):
    # ---- conv2d_1 + LeakyReLU: one lane-dense MXU matmul --------------------
    y1 = jnp.dot(x_ref[...], w1_ref[...], preferred_element_type=jnp.float32)
    y1 = _lrelu(y1)                      # (M1, 128); lanes >= f are exactly 0.

    # ---- conv2d_2: per-tap one-hot row gather + weight matmul ----------------
    # w2 arrives compact (K*K, f, 128); zero-pad its cin to 128 once in VMEM so
    # every MXU op below is K = N = 128 lane-dense.  Zero FLOPs are free here,
    # and this avoids DMA'ing ~1 MB of zero-padded weights from HBM.
    w2f = jnp.concatenate(
        [w2_ref[...], jnp.zeros((n_k2, f_pad - f, f_pad), jnp.float32)], axis=1)

    acc2 = jnp.zeros((m2, f_pad), jnp.float32)
    for k in range(n_k2):
        # bf16 0/1 gather matrix (exact); promoted to f32 for the MXU.
        gk = jnp.dot(t2_ref[k].astype(jnp.float32), y1,
                     preferred_element_type=jnp.float32)          # (M2, 128)
        acc2 = acc2 + jnp.dot(gk, w2f[k],
                              preferred_element_type=jnp.float32)  # (M2, 128)

    # ---- BatchNorm2d (training-mode biased batch stats) + LeakyReLU ----------
    # gamma is folded into the scale.  The 120 zero-padded lanes stay exactly 0
    # because gamma = beta = 0 there (zero-pad invariant asserted in wrapper).
    gb = gb_ref[...]                                              # (2, 128)
    inv_m = 1.0 / m2
    mean = jnp.sum(acc2, axis=0, keepdims=True) * inv_m
    cen = acc2 - mean
    var = jnp.sum(cen * cen, axis=0, keepdims=True) * inv_m
    scale = jax.lax.rsqrt(var + BN_EPS) * gb[0:1, :]
    # Lane-dense (M2, 128) store -> unmasked full-lane vst.
    o_ref[...] = _lrelu(cen * scale + gb[1:2, :]).astype(o_ref.dtype)


# ---------------------------------------------------------------------------
# Wrapper: tiny layout prep (im2col on the ~6 KB input, weight flattening)
# plus ONE pallas_call.
# ---------------------------------------------------------------------------

def input_forward(x, w1, w2, gamma, beta, *, conv1s, conv2s, p1, p2=1):
    n, c, h, w = x.shape
    f, cin, k1, _ = w1.shape
    k2 = w2.shape[2]
    assert cin == c

    oh1 = _out_size(h, k1, conv1s, p1)
    ow1 = _out_size(w, k1, conv1s, p1)
    oh2 = _out_size(oh1, k2, conv2s, p2)
    ow2 = _out_size(ow1, k2, conv2s, p2)
    m1 = n * oh1 * ow1
    m2 = n * oh2 * ow2
    f_pad = _cdiv(f, LANE) * LANE
    kc = k1 * k1 * c
    kc_pad = _cdiv(kc, LANE) * LANE
    # Sublane-granule friendly shapes for this config.
    # TODO(synk): zero-pad the row dims to multiples of 8 (and keep BN's 1/m2
    # on the real row count) for odd batch/spatial sizes.
    assert m1 % 8 == 0 and m2 % 8 == 0 and f % 8 == 0

    # conv1 im2col in the wrapper: a handful of tiny XLA ops on the ~6 KB input
    # (replaces the old 330-512 KB one-hot t1 constant + 8 gather matmuls).
    x_nhwc = jnp.transpose(x, (0, 2, 3, 1))
    xpad = jnp.pad(x_nhwc, ((0, 0), (p1, p1), (p1, p1), (0, 0)))
    taps = []
    for i in range(k1):
        for j in range(k1):
            taps.append(xpad[:, i:i + conv1s * (oh1 - 1) + 1:conv1s,
                             j:j + conv1s * (ow1 - 1) + 1:conv1s, :])
    xcol = jnp.stack(taps, axis=3).reshape(m1, kc)    # rows (n,h1,w1), cols (i,j,c)
    xcol = jnp.pad(xcol, ((0, 0), (0, kc_pad - kc)))  # lane-dense (M1, 128)

    # conv1 weight (f,c,k,k) -> (kc_pad, f_pad); rows match xcol's (i,j,c) order,
    # Cout zero-padded to a full 128-lane width so y1 is lane-dense on-chip.
    w1f = jnp.transpose(w1, (2, 3, 1, 0)).reshape(kc, f)
    w1f = jnp.pad(w1f, ((0, kc_pad - kc), (0, f_pad - f)))

    # conv2 weight per tap: (K*K, cin=f, cout -> 128).  cin stays compact here
    # (padded to 128 inside the kernel) to keep the HBM->VMEM weight DMA small.
    w2c = jnp.transpose(w2, (2, 3, 1, 0)).reshape(k2 * k2, f, f)
    w2c = jnp.pad(w2c, ((0, 0), (0, 0), (0, f_pad - f)))

    # gamma/beta in one (2,128) ref; padded lanes are 0 -> stay inert through BN.
    gb = jnp.stack([jnp.pad(gamma, (0, f_pad - f)),
                    jnp.pad(beta, (0, f_pad - f))])

    # conv2 one-hot tap-gather constants: host-built numpy, stored as bf16
    # (0/1 is exact in bf16; halves the constant HBM->VMEM DMA).
    t2 = jnp.asarray(_build_gather_conv2(n, oh1, ow1, oh2, ow2, k2, conv2s, p2),
                     dtype=jnp.bfloat16)

    kern = functools.partial(_fused_input_kernel,
                             n_k2=k2 * k2, m2=m2, f=f, f_pad=f_pad)
    vmem = pl.BlockSpec(memory_space=pltpu.MemorySpace.VMEM)
    y2 = pl.pallas_call(
        kern,
        out_shape=jax.ShapeDtypeStruct((m2, f_pad), jnp.float32),
        in_specs=[vmem] * 5,
        out_specs=vmem,
    )(xcol, w1f, t2, w2c, gb)

    # Back to the module's NCHW layout (tiny; XLA fuses slice+reshape+transpose).
    return y2[:, :f].reshape(n, oh2, ow2, f).transpose(0, 3, 1, 2)


# ---------------------------------------------------------------------------
# Pure-JAX reference (for the correctness check in main).
# ---------------------------------------------------------------------------

def _reference_forward(x, w1, w2, gamma, beta, *, conv1s, conv2s, p1, p2=1):
    dn1 = jax.lax.conv_dimension_numbers(x.shape, w1.shape,
                                         ('NCHW', 'OIHW', 'NCHW'))
    y = jax.lax.conv_general_dilated(x, w1, (conv1s, conv1s),
                                     [(p1, p1), (p1, p1)],
                                     dimension_numbers=dn1,
                                     precision=jax.lax.Precision.HIGHEST)
    y = _lrelu(y)
    dn2 = jax.lax.conv_dimension_numbers(y.shape, w2.shape,
                                         ('NCHW', 'OIHW', 'NCHW'))
    y = jax.lax.conv_general_dilated(y, w2, (conv2s, conv2s),
                                     [(p2, p2), (p2, p2)],
                                     dimension_numbers=dn2,
                                     precision=jax.lax.Precision.HIGHEST)
    mean = jnp.mean(y, axis=(0, 2, 3), keepdims=True)
    var = jnp.mean((y - mean) ** 2, axis=(0, 2, 3), keepdims=True)
    y = (y - mean) * jax.lax.rsqrt(var + BN_EPS)
    y = y * gamma.reshape(1, -1, 1, 1) + beta.reshape(1, -1, 1, 1)
    return _lrelu(y)


if __name__ == "__main__":
    # Module configuration (downsample_factor=4 -> conv1s=2, conv2s=2, p1=1)
    downsample_factor = 4
    filters = 8
    conv1s, conv2s, p1 = 2, 2, 1
    if downsample_factor <= 2:
        conv2s, p1 = 1, 2
    if downsample_factor == 1:
        conv1s = 1

    key = jax.random.PRNGKey(0)
    kx, kw1, kw2, kg, kb = jax.random.split(key, 5)
    x = jax.random.normal(kx, (2, 3, 16, 16), jnp.float32)                # NCHW
    w1 = 0.1 * jax.random.normal(kw1, (filters, 3, 4, 4), jnp.float32)    # conv2d_1
    w2 = 0.1 * jax.random.normal(kw2, (filters, filters, 4, 4), jnp.float32)
    gamma = 1.0 + 0.1 * jax.random.normal(kg, (filters,), jnp.float32)    # BN weight
    beta = 0.1 * jax.random.normal(kb, (filters,), jnp.float32)           # BN bias

    fwd = jax.jit(functools.partial(input_forward,
                                    conv1s=conv1s, conv2s=conv2s, p1=p1))
    out = fwd(x, w1, w2, gamma, beta)
    jax.block_until_ready(out)
    assert out.shape == (2, filters, 4, 4), out.shape

    ref = _reference_forward(x, w1, w2, gamma, beta,
                             conv1s=conv1s, conv2s=conv2s, p1=p1)
    np.testing.assert_allclose(np.asarray(out), np.asarray(ref),
                               rtol=2e-3, atol=2e-3)
    print("KERNEL_OK")
</pallas_src>

<mosaic_0001>
module attributes {stable_mosaic.version = 11 : i64} {
  func.func @_fused_input_kernel(%arg0: memref<128x128xf32, #tpu.memory_space<vmem>>, %arg1: memref<128x128xf32, #tpu.memory_space<vmem>>, %arg2: memref<16x32x128xbf16, #tpu.memory_space<vmem>>, %arg3: memref<16x8x128xf32, #tpu.memory_space<vmem>>, %arg4: memref<2x128xf32, #tpu.memory_space<vmem>>, %arg5: memref<32x128xf32, #tpu.memory_space<vmem>>) attributes {dimension_semantics = [], scalar_prefetch = 0 : i64, scratch_operands = 0 : i64, tpu.core_type = #tpu.core_type<tc>} {
    %c0 = arith.constant 0 : index
    %c0_0 = arith.constant 0 : index
    %0 = vector.load %arg0[%c0, %c0_0] : memref<128x128xf32, #tpu.memory_space<vmem>>, vector<128x128xf32>
    %c0_1 = arith.constant 0 : index
    %c0_2 = arith.constant 0 : index
    %1 = vector.load %arg1[%c0_1, %c0_2] : memref<128x128xf32, #tpu.memory_space<vmem>>, vector<128x128xf32>
    %cst = arith.constant dense<0.000000e+00> : vector<128x128xf32>
    %2 = tpu.matmul %0, %1, %cst {dimension_numbers = #tpu.dot_dimension_numbers<[1], [0], [0], [1], [0, 0, 1, 1], [], []>} : vector<128x128xf32>, vector<128x128xf32>, vector<128x128xf32> -> vector<128x128xf32>
    %cst_3 = arith.constant 0.000000e+00 : f32
    %3 = vector.broadcast %cst_3 : f32 to vector<128x128xf32>
    %4 = arith.cmpf ogt, %2, %3 : vector<128x128xf32>
    %cst_4 = arith.constant 2.000000e-01 : f32
    %5 = vector.broadcast %cst_4 : f32 to vector<128x128xf32>
    %6 = arith.mulf %5, %2 : vector<128x128xf32>
    %7 = arith.select %4, %2, %6 : vector<128x128xi1>, vector<128x128xf32>
    %c0_5 = arith.constant 0 : index
    %c0_6 = arith.constant 0 : index
    %c0_7 = arith.constant 0 : index
    %8 = vector.load %arg3[%c0_5, %c0_6, %c0_7] : memref<16x8x128xf32, #tpu.memory_space<vmem>>, vector<16x8x128xf32>
    %cst_8 = arith.constant 0.000000e+00 : f32
    %9 = vector.broadcast %cst_8 : f32 to vector<16x120x128xf32>
    %10 = tpu.concatenate %8, %9 in 1 : vector<16x8x128xf32>, vector<16x120x128xf32> -> vector<16x128x128xf32>
    %cst_9 = arith.constant 0.000000e+00 : f32
    %11 = vector.broadcast %cst_9 : f32 to vector<32x128xf32>
    %c0_10 = arith.constant 0 : index
    %c0_11 = arith.constant 0 : index
    %c0_12 = arith.constant 0 : index
    %12 = vector.load %arg2[%c0_10, %c0_11, %c0_12] : memref<16x32x128xbf16, #tpu.memory_space<vmem>>, vector<1x32x128xbf16>
    %13 = vector.shape_cast %12 : vector<1x32x128xbf16> to vector<32x128xbf16>
    %14 = arith.extf %13 : vector<32x128xbf16> to vector<32x128xf32>
    %cst_13 = arith.constant dense<0.000000e+00> : vector<32x128xf32>
    %15 = tpu.matmul %14, %7, %cst_13 {dimension_numbers = #tpu.dot_dimension_numbers<[1], [0], [0], [1], [0, 0, 1, 1], [], []>} : vector<32x128xf32>, vector<128x128xf32>, vector<32x128xf32> -> vector<32x128xf32>
    %16 = vector.extract_strided_slice %10 {offsets = [0, 0, 0], sizes = [1, 128, 128], strides = [1, 1, 1]} : vector<16x128x128xf32> to vector<1x128x128xf32>
    %17 = vector.shape_cast %16 : vector<1x128x128xf32> to vector<128x128xf32>
    %cst_14 = arith.constant dense<0.000000e+00> : vector<32x128xf32>
    %18 = tpu.matmul %15, %17, %cst_14 {dimension_numbers = #tpu.dot_dimension_numbers<[1], [0], [0], [1], [0, 0, 1, 1], [], []>} : vector<32x128xf32>, vector<128x128xf32>, vector<32x128xf32> -> vector<32x128xf32>
    %19 = arith.addf %11, %18 : vector<32x128xf32>
    %c1 = arith.constant 1 : index
    %c0_15 = arith.constant 0 : index
    %c0_16 = arith.constant 0 : index
    %20 = vector.load %arg2[%c1, %c0_15, %c0_16] : memref<16x32x128xbf16, #tpu.memory_space<vmem>>, vector<1x32x128xbf16>
    %21 = vector.shape_cast %20 : vector<1x32x128xbf16> to vector<32x128xbf16>
    %22 = arith.extf %21 : vector<32x128xbf16> to vector<32x128xf32>
    %cst_17 = arith.constant dense<0.000000e+00> : vector<32x128xf32>
    %23 = tpu.matmul %22, %7, %cst_17 {dimension_numbers = #tpu.dot_dimension_numbers<[1], [0], [0], [1], [0, 0, 1, 1], [], []>} : vector<32x128xf32>, vector<128x128xf32>, vector<32x128xf32> -> vector<32x128xf32>
    %24 = vector.extract_strided_slice %10 {offsets = [1, 0, 0], sizes = [1, 128, 128], strides = [1, 1, 1]} : vector<16x128x128xf32> to vector<1x128x128xf32>
    %25 = vector.shape_cast %24 : vector<1x128x128xf32> to vector<128x128xf32>
    %cst_18 = arith.constant dense<0.000000e+00> : vector<32x128xf32>
    %26 = tpu.matmul %23, %25, %cst_18 {dimension_numbers = #tpu.dot_dimension_numbers<[1], [0], [0], [1], [0, 0, 1, 1], [], []>} : vector<32x128xf32>, vector<128x128xf32>, vector<32x128xf32> -> vector<32x128xf32>
    %27 = arith.addf %19, %26 : vector<32x128xf32>
    %c2 = arith.constant 2 : index
    %c0_19 = arith.constant 0 : index
    %c0_20 = arith.constant 0 : index
    %28 = vector.load %arg2[%c2, %c0_19, %c0_20] : memref<16x32x128xbf16, #tpu.memory_space<vmem>>, vector<1x32x128xbf16>
    %29 = vector.shape_cast %28 : vector<1x32x128xbf16> to vector<32x128xbf16>
    %30 = arith.extf %29 : vector<32x128xbf16> to vector<32x128xf32>
    %cst_21 = arith.constant dense<0.000000e+00> : vector<32x128xf32>
    %31 = tpu.matmul %30, %7, %cst_21 {dimension_numbers = #tpu.dot_dimension_numbers<[1], [0], [0], [1], [0, 0, 1, 1], [], []>} : vector<32x128xf32>, vector<128x128xf32>, vector<32x128xf32> -> vector<32x128xf32>
    %32 = vector.extract_strided_slice %10 {offsets = [2, 0, 0], sizes = [1, 128, 128], strides = [1, 1, 1]} : vector<16x128x128xf32> to vector<1x128x128xf32>
    %33 = vector.shape_cast %32 : vector<1x128x128xf32> to vector<128x128xf32>
    %cst_22 = arith.constant dense<0.000000e+00> : vector<32x128xf32>
    %34 = tpu.matmul %31, %33, %cst_22 {dimension_numbers = #tpu.dot_dimension_numbers<[1], [0], [0], [1], [0, 0, 1, 1], [], []>} : vector<32x128xf32>, vector<128x128xf32>, vector<32x128xf32> -> vector<32x128xf32>
    %35 = arith.addf %27, %34 : vector<32x128xf32>
    %c3 = arith.constant 3 : index
    %c0_23 = arith.constant 0 : index
    %c0_24 = arith.constant 0 : index
    %36 = vector.load %arg2[%c3, %c0_23, %c0_24] : memref<16x32x128xbf16, #tpu.memory_space<vmem>>, vector<1x32x128xbf16>
    %37 = vector.shape_cast %36 : vector<1x32x128xbf16> to vector<32x128xbf16>
    %38 = arith.extf %37 : vector<32x128xbf16> to vector<32x128xf32>
    %cst_25 = arith.constant dense<0.000000e+00> : vector<32x128xf32>
    %39 = tpu.matmul %38, %7, %cst_25 {dimension_numbers = #tpu.dot_dimension_numbers<[1], [0], [0], [1], [0, 0, 1, 1], [], []>} : vector<32x128xf32>, vector<128x128xf32>, vector<32x128xf32> -> vector<32x128xf32>
    %40 = vector.extract_strided_slice %10 {offsets = [3, 0, 0], sizes = [1, 128, 128], strides = [1, 1, 1]} : vector<16x128x128xf32> to vector<1x128x128xf32>
    %41 = vector.shape_cast %40 : vector<1x128x128xf32> to vector<128x128xf32>
    %cst_26 = arith.constant dense<0.000000e+00> : vector<32x128xf32>
    %42 = tpu.matmul %39, %41, %cst_26 {dimension_numbers = #tpu.dot_dimension_numbers<[1], [0], [0], [1], [0, 0, 1, 1], [], []>} : vector<32x128xf32>, vector<128x128xf32>, vector<32x128xf32> -> vector<32x128xf32>
    %43 = arith.addf %35, %42 : vector<32x128xf32>
    %c4 = arith.constant 4 : index
    %c0_27 = arith.constant 0 : index
    %c0_28 = arith.constant 0 : index
    %44 = vector.load %arg2[%c4, %c0_27, %c0_28] : memref<16x32x128xbf16, #tpu.memory_space<vmem>>, vector<1x32x128xbf16>
    %45 = vector.shape_cast %44 : vector<1x32x128xbf16> to vector<32x128xbf16>
    %46 = arith.extf %45 : vector<32x128xbf16> to vector<32x128xf32>
    %cst_29 = arith.constant dense<0.000000e+00> : vector<32x128xf32>
    %47 = tpu.matmul %46, %7, %cst_29 {dimension_numbers = #tpu.dot_dimension_numbers<[1], [0], [0], [1], [0, 0, 1, 1], [], []>} : vector<32x128xf32>, vector<128x128xf32>, vector<32x128xf32> -> vector<32x128xf32>
    %48 = vector.extract_strided_slice %10 {offsets = [4, 0, 0], sizes = [1, 128, 128], strides = [1, 1, 1]} : vector<16x128x128xf32> to vector<1x128x128xf32>
    %49 = vector.shape_cast %48 : vector<1x128x128xf32> to vector<128x128xf32>
    %cst_30 = arith.constant dense<0.000000e+00> : vector<32x128xf32>
    %50 = tpu.matmul %47, %49, %cst_30 {dimension_numbers = #tpu.dot_dimension_numbers<[1], [0], [0], [1], [0, 0, 1, 1], [], []>} : vector<32x128xf32>, vector<128x128xf32>, vector<32x128xf32> -> vector<32x128xf32>
    %51 = arith.addf %43, %50 : vector<32x128xf32>
    %c5 = arith.constant 5 : index
    %c0_31 = arith.constant 0 : index
    %c0_32 = arith.constant 0 : index
    %52 = vector.load %arg2[%c5, %c0_31, %c0_32] : memref<16x32x128xbf16, #tpu.memory_space<vmem>>, vector<1x32x128xbf16>
    %53 = vector.shape_cast %52 : vector<1x32x128xbf16> to vector<32x128xbf16>
    %54 = arith.extf %53 : vector<32x128xbf16> to vector<32x128xf32>
    %cst_33 = arith.constant dense<0.000000e+00> : vector<32x128xf32>
    %55 = tpu.matmul %54, %7, %cst_33 {dimension_numbers = #tpu.dot_dimension_numbers<[1], [0], [0], [1], [0, 0, 1, 1], [], []>} : vector<32x128xf32>, vector<128x128xf32>, vector<32x128xf32> -> vector<32x128xf32>
    %56 = vector.extract_strided_slice %10 {offsets = [5, 0, 0], sizes = [1, 128, 128], strides = [1, 1, 1]} : vector<16x128x128xf32> to vector<1x128x128xf32>
    %57 = vector.shape_cast %56 : vector<1x128x128xf32> to vector<128x128xf32>
    %cst_34 = arith.constant dense<0.000000e+00> : vector<32x128xf32>
    %58 = tpu.matmul %55, %57, %cst_34 {dimension_numbers = #tpu.dot_dimension_numbers<[1], [0], [0], [1], [0, 0, 1, 1], [], []>} : vector<32x128xf32>, vector<128x128xf32>, vector<32x128xf32> -> vector<32x128xf32>
    %59 = arith.addf %51, %58 : vector<32x128xf32>
    %c6 = arith.constant 6 : index
    %c0_35 = arith.constant 0 : index
    %c0_36 = arith.constant 0 : index
    %60 = vector.load %arg2[%c6, %c0_35, %c0_36] : memref<16x32x128xbf16, #tpu.memory_space<vmem>>, vector<1x32x128xbf16>
    %61 = vector.shape_cast %60 : vector<1x32x128xbf16> to vector<32x128xbf16>
    %62 = arith.extf %61 : vector<32x128xbf16> to vector<32x128xf32>
    %cst_37 = arith.constant dense<0.000000e+00> : vector<32x128xf32>
    %63 = tpu.matmul %62, %7, %cst_37 {dimension_numbers = #tpu.dot_dimension_numbers<[1], [0], [0], [1], [0, 0, 1, 1], [], []>} : vector<32x128xf32>, vector<128x128xf32>, vector<32x128xf32> -> vector<32x128xf32>
    %64 = vector.extract_strided_slice %10 {offsets = [6, 0, 0], sizes = [1, 128, 128], strides = [1, 1, 1]} : vector<16x128x128xf32> to vector<1x128x128xf32>
    %65 = vector.shape_cast %64 : vector<1x128x128xf32> to vector<128x128xf32>
    %cst_38 = arith.constant dense<0.000000e+00> : vector<32x128xf32>
    %66 = tpu.matmul %63, %65, %cst_38 {dimension_numbers = #tpu.dot_dimension_numbers<[1], [0], [0], [1], [0, 0, 1, 1], [], []>} : vector<32x128xf32>, vector<128x128xf32>, vector<32x128xf32> -> vector<32x128xf32>
    %67 = arith.addf %59, %66 : vector<32x128xf32>
    %c7 = arith.constant 7 : index
    %c0_39 = arith.constant 0 : index
    %c0_40 = arith.constant 0 : index
    %68 = vector.load %arg2[%c7, %c0_39, %c0_40] : memref<16x32x128xbf16, #tpu.memory_space<vmem>>, vector<1x32x128xbf16>
    %69 = vector.shape_cast %68 : vector<1x32x128xbf16> to vector<32x128xbf16>
    %70 = arith.extf %69 : vector<32x128xbf16> to vector<32x128xf32>
    %cst_41 = arith.constant dense<0.000000e+00> : vector<32x128xf32>
    %71 = tpu.matmul %70, %7, %cst_41 {dimension_numbers = #tpu.dot_dimension_numbers<[1], [0], [0], [1], [0, 0, 1, 1], [], []>} : vector<32x128xf32>, vector<128x128xf32>, vector<32x128xf32> -> vector<32x128xf32>
    %72 = vector.extract_strided_slice %10 {offsets = [7, 0, 0], sizes = [1, 128, 128], strides = [1, 1, 1]} : vector<16x128x128xf32> to vector<1x128x128xf32>
    %73 = vector.shape_cast %72 : vector<1x128x128xf32> to vector<128x128xf32>
    %cst_42 = arith.constant dense<0.000000e+00> : vector<32x128xf32>
    %74 = tpu.matmul %71, %73, %cst_42 {dimension_numbers = #tpu.dot_dimension_numbers<[1], [0], [0], [1], [0, 0, 1, 1], [], []>} : vector<32x128xf32>, vector<128x128xf32>, vector<32x128xf32> -> vector<32x128xf32>
    %75 = arith.addf %67, %74 : vector<32x128xf32>
    %c8 = arith.constant 8 : index
    %c0_43 = arith.constant 0 : index
    %c0_44 = arith.constant 0 : index
    %76 = vector.load %arg2[%c8, %c0_43, %c0_44] : memref<16x32x128xbf16, #tpu.memory_space<vmem>>, vector<1x32x128xbf16>
    %77 = vector.shape_cast %76 : vector<1x32x128xbf16> to vector<32x128xbf16>
    %78 = arith.extf %77 : vector<32x128xbf16> to vector<32x128xf32>
    %cst_45 = arith.constant dense<0.000000e+00> : vector<32x128xf32>
    %79 = tpu.matmul %78, %7, %cst_45 {dimension_numbers = #tpu.dot_dimension_numbers<[1], [0], [0], [1], [0, 0, 1, 1], [], []>} : vector<32x128xf32>, vector<128x128xf32>, vector<32x128xf32> -> vector<32x128xf32>
    %80 = vector.extract_strided_slice %10 {offsets = [8, 0, 0], sizes = [1, 128, 128], strides = [1, 1, 1]} : vector<16x128x128xf32> to vector<1x128x128xf32>
    %81 = vector.shape_cast %80 : vector<1x128x128xf32> to vector<128x128xf32>
    %cst_46 = arith.constant dense<0.000000e+00> : vector<32x128xf32>
    %82 = tpu.matmul %79, %81, %cst_46 {dimension_numbers = #tpu.dot_dimension_numbers<[1], [0], [0], [1], [0, 0, 1, 1], [], []>} : vector<32x128xf32>, vector<128x128xf32>, vector<32x128xf32> -> vector<32x128xf32>
    %83 = arith.addf %75, %82 : vector<32x128xf32>
    %c9 = arith.constant 9 : index
    %c0_47 = arith.constant 0 : index
    %c0_48 = arith.constant 0 : index
    %84 = vector.load %arg2[%c9, %c0_47, %c0_48] : memref<16x32x128xbf16, #tpu.memory_space<vmem>>, vector<1x32x128xbf16>
    %85 = vector.shape_cast %84 : vector<1x32x128xbf16> to vector<32x128xbf16>
    %86 = arith.extf %85 : vector<32x128xbf16> to vector<32x128xf32>
    %cst_49 = arith.constant dense<0.000000e+00> : vector<32x128xf32>
    %87 = tpu.matmul %86, %7, %cst_49 {dimension_numbers = #tpu.dot_dimension_numbers<[1], [0], [0], [1], [0, 0, 1, 1], [], []>} : vector<32x128xf32>, vector<128x128xf32>, vector<32x128xf32> -> vector<32x128xf32>
    %88 = vector.extract_strided_slice %10 {offsets = [9, 0, 0], sizes = [1, 128, 128], strides = [1, 1, 1]} : vector<16x128x128xf32> to vector<1x128x128xf32>
    %89 = vector.shape_cast %88 : vector<1x128x128xf32> to vector<128x128xf32>
    %cst_50 = arith.constant dense<0.000000e+00> : vector<32x128xf32>
    %90 = tpu.matmul %87, %89, %cst_50 {dimension_numbers = #tpu.dot_dimension_numbers<[1], [0], [0], [1], [0, 0, 1, 1], [], []>} : vector<32x128xf32>, vector<128x128xf32>, vector<32x128xf32> -> vector<32x128xf32>
    %91 = arith.addf %83, %90 : vector<32x128xf32>
    %c10 = arith.constant 10 : index
    %c0_51 = arith.constant 0 : index
    %c0_52 = arith.constant 0 : index
    %92 = vector.load %arg2[%c10, %c0_51, %c0_52] : memref<16x32x128xbf16, #tpu.memory_space<vmem>>, vector<1x32x128xbf16>
    %93 = vector.shape_cast %92 : vector<1x32x128xbf16> to vector<32x128xbf16>
    %94 = arith.extf %93 : vector<32x128xbf16> to vector<32x128xf32>
    %cst_53 = arith.constant dense<0.000000e+00> : vector<32x128xf32>
    %95 = tpu.matmul %94, %7, %cst_53 {dimension_numbers = #tpu.dot_dimension_numbers<[1], [0], [0], [1], [0, 0, 1, 1], [], []>} : vector<32x128xf32>, vector<128x128xf32>, vector<32x128xf32> -> vector<32x128xf32>
    %96 = vector.extract_strided_slice %10 {offsets = [10, 0, 0], sizes = [1, 128, 128], strides = [1, 1, 1]} : vector<16x128x128xf32> to vector<1x128x128xf32>
    %97 = vector.shape_cast %96 : vector<1x128x128xf32> to vector<128x128xf32>
    %cst_54 = arith.constant dense<0.000000e+00> : vector<32x128xf32>
    %98 = tpu.matmul %95, %97, %cst_54 {dimension_numbers = #tpu.dot_dimension_numbers<[1], [0], [0], [1], [0, 0, 1, 1], [], []>} : vector<32x128xf32>, vector<128x128xf32>, vector<32x128xf32> -> vector<32x128xf32>
    %99 = arith.addf %91, %98 : vector<32x128xf32>
    %c11 = arith.constant 11 : index
    %c0_55 = arith.constant 0 : index
    %c0_56 = arith.constant 0 : index
    %100 = vector.load %arg2[%c11, %c0_55, %c0_56] : memref<16x32x128xbf16, #tpu.memory_space<vmem>>, vector<1x32x128xbf16>
    %101 = vector.shape_cast %100 : vector<1x32x128xbf16> to vector<32x128xbf16>
    %102 = arith.extf %101 : vector<32x128xbf16> to vector<32x128xf32>
    %cst_57 = arith.constant dense<0.000000e+00> : vector<32x128xf32>
    %103 = tpu.matmul %102, %7, %cst_57 {dimension_numbers = #tpu.dot_dimension_numbers<[1], [0], [0], [1], [0, 0, 1, 1], [], []>} : vector<32x128xf32>, vector<128x128xf32>, vector<32x128xf32> -> vector<32x128xf32>
    %104 = vector.extract_strided_slice %10 {offsets = [11, 0, 0], sizes = [1, 128, 128], strides = [1, 1, 1]} : vector<16x128x128xf32> to vector<1x128x128xf32>
    %105 = vector.shape_cast %104 : vector<1x128x128xf32> to vector<128x128xf32>
    %cst_58 = arith.constant dense<0.000000e+00> : vector<32x128xf32>
    %106 = tpu.matmul %103, %105, %cst_58 {dimension_numbers = #tpu.dot_dimension_numbers<[1], [0], [0], [1], [0, 0, 1, 1], [], []>} : vector<32x128xf32>, vector<128x128xf32>, vector<32x128xf32> -> vector<32x128xf32>
    %107 = arith.addf %99, %106 : vector<32x128xf32>
    %c12 = arith.constant 12 : index
    %c0_59 = arith.constant 0 : index
    %c0_60 = arith.constant 0 : index
    %108 = vector.load %arg2[%c12, %c0_59, %c0_60] : memref<16x32x128xbf16, #tpu.memory_space<vmem>>, vector<1x32x128xbf16>
    %109 = vector.shape_cast %108 : vector<1x32x128xbf16> to vector<32x128xbf16>
    %110 = arith.extf %109 : vector<32x128xbf16> to vector<32x128xf32>
    %cst_61 = arith.constant dense<0.000000e+00> : vector<32x128xf32>
    %111 = tpu.matmul %110, %7, %cst_61 {dimension_numbers = #tpu.dot_dimension_numbers<[1], [0], [0], [1], [0, 0, 1, 1], [], []>} : vector<32x128xf32>, vector<128x128xf32>, vector<32x128xf32> -> vector<32x128xf32>
    %112 = vector.extract_strided_slice %10 {offsets = [12, 0, 0], sizes = [1, 128, 128], strides = [1, 1, 1]} : vector<16x128x128xf32> to vector<1x128x128xf32>
    %113 = vector.shape_cast %112 : vector<1x128x128xf32> to vector<128x128xf32>
    %cst_62 = arith.constant dense<0.000000e+00> : vector<32x128xf32>
    %114 = tpu.matmul %111, %113, %cst_62 {dimension_numbers = #tpu.dot_dimension_numbers<[1], [0], [0], [1], [0, 0, 1, 1], [], []>} : vector<32x128xf32>, vector<128x128xf32>, vector<32x128xf32> -> vector<32x128xf32>
    %115 = arith.addf %107, %114 : vector<32x128xf32>
    %c13 = arith.constant 13 : index
    %c0_63 = arith.constant 0 : index
    %c0_64 = arith.constant 0 : index
    %116 = vector.load %arg2[%c13, %c0_63, %c0_64] : memref<16x32x128xbf16, #tpu.memory_space<vmem>>, vector<1x32x128xbf16>
    %117 = vector.shape_cast %116 : vector<1x32x128xbf16> to vector<32x128xbf16>
    %118 = arith.extf %117 : vector<32x128xbf16> to vector<32x128xf32>
    %cst_65 = arith.constant dense<0.000000e+00> : vector<32x128xf32>
    %119 = tpu.matmul %118, %7, %cst_65 {dimension_numbers = #tpu.dot_dimension_numbers<[1], [0], [0], [1], [0, 0, 1, 1], [], []>} : vector<32x128xf32>, vector<128x128xf32>, vector<32x128xf32> -> vector<32x128xf32>
    %120 = vector.extract_strided_slice %10 {offsets = [13, 0, 0], sizes = [1, 128, 128], strides = [1, 1, 1]} : vector<16x128x128xf32> to vector<1x128x128xf32>
    %121 = vector.shape_cast %120 : vector<1x128x128xf32> to vector<128x128xf32>
    %cst_66 = arith.constant dense<0.000000e+00> : vector<32x128xf32>
    %122 = tpu.matmul %119, %121, %cst_66 {dimension_numbers = #tpu.dot_dimension_numbers<[1], [0], [0], [1], [0, 0, 1, 1], [], []>} : vector<32x128xf32>, vector<128x128xf32>, vector<32x128xf32> -> vector<32x128xf32>
    %123 = arith.addf %115, %122 : vector<32x128xf32>
    %c14 = arith.constant 14 : index
    %c0_67 = arith.constant 0 : index
    %c0_68 = arith.constant 0 : index
    %124 = vector.load %arg2[%c14, %c0_67, %c0_68] : memref<16x32x128xbf16, #tpu.memory_space<vmem>>, vector<1x32x128xbf16>
    %125 = vector.shape_cast %124 : vector<1x32x128xbf16> to vector<32x128xbf16>
    %126 = arith.extf %125 : vector<32x128xbf16> to vector<32x128xf32>
    %cst_69 = arith.constant dense<0.000000e+00> : vector<32x128xf32>
    %127 = tpu.matmul %126, %7, %cst_69 {dimension_numbers = #tpu.dot_dimension_numbers<[1], [0], [0], [1], [0, 0, 1, 1], [], []>} : vector<32x128xf32>, vector<128x128xf32>, vector<32x128xf32> -> vector<32x128xf32>
    %128 = vector.extract_strided_slice %10 {offsets = [14, 0, 0], sizes = [1, 128, 128], strides = [1, 1, 1]} : vector<16x128x128xf32> to vector<1x128x128xf32>
    %129 = vector.shape_cast %128 : vector<1x128x128xf32> to vector<128x128xf32>
    %cst_70 = arith.constant dense<0.000000e+00> : vector<32x128xf32>
    %130 = tpu.matmul %127, %129, %cst_70 {dimension_numbers = #tpu.dot_dimension_numbers<[1], [0], [0], [1], [0, 0, 1, 1], [], []>} : vector<32x128xf32>, vector<128x128xf32>, vector<32x128xf32> -> vector<32x128xf32>
    %131 = arith.addf %123, %130 : vector<32x128xf32>
    %c15 = arith.constant 15 : index
    %c0_71 = arith.constant 0 : index
    %c0_72 = arith.constant 0 : index
    %132 = vector.load %arg2[%c15, %c0_71, %c0_72] : memref<16x32x128xbf16, #tpu.memory_space<vmem>>, vector<1x32x128xbf16>
    %133 = vector.shape_cast %132 : vector<1x32x128xbf16> to vector<32x128xbf16>
    %134 = arith.extf %133 : vector<32x128xbf16> to vector<32x128xf32>
    %cst_73 = arith.constant dense<0.000000e+00> : vector<32x128xf32>
    %135 = tpu.matmul %134, %7, %cst_73 {dimension_numbers = #tpu.dot_dimension_numbers<[1], [0], [0], [1], [0, 0, 1, 1], [], []>} : vector<32x128xf32>, vector<128x128xf32>, vector<32x128xf32> -> vector<32x128xf32>
    %136 = vector.extract_strided_slice %10 {offsets = [15, 0, 0], sizes = [1, 128, 128], strides = [1, 1, 1]} : vector<16x128x128xf32> to vector<1x128x128xf32>
    %137 = vector.shape_cast %136 : vector<1x128x128xf32> to vector<128x128xf32>
    %cst_74 = arith.constant dense<0.000000e+00> : vector<32x128xf32>
    %138 = tpu.matmul %135, %137, %cst_74 {dimension_numbers = #tpu.dot_dimension_numbers<[1], [0], [0], [1], [0, 0, 1, 1], [], []>} : vector<32x128xf32>, vector<128x128xf32>, vector<32x128xf32> -> vector<32x128xf32>
    %139 = arith.addf %131, %138 : vector<32x128xf32>
    %c0_75 = arith.constant 0 : index
    %c0_76 = arith.constant 0 : index
    %140 = vector.load %arg4[%c0_75, %c0_76] : memref<2x128xf32, #tpu.memory_space<vmem>>, vector<2x128xf32>
    %cst_77 = arith.constant dense<0.000000e+00> : vector<128xf32>
    %141 = vector.multi_reduction <add>, %139, %cst_77 [0] : vector<32x128xf32> to vector<128xf32>
    %142 = vector.shape_cast %141 : vector<128xf32> to vector<1x128xf32>
    %cst_78 = arith.constant 3.125000e-02 : f32
    %143 = vector.broadcast %cst_78 : f32 to vector<1x128xf32>
    %144 = arith.mulf %142, %143 : vector<1x128xf32>
    %145 = vector.broadcast %144 : vector<1x128xf32> to vector<32x128xf32>
    %146 = arith.subf %139, %145 : vector<32x128xf32>
    %147 = arith.mulf %146, %146 : vector<32x128xf32>
    %cst_79 = arith.constant dense<0.000000e+00> : vector<128xf32>
    %148 = vector.multi_reduction <add>, %147, %cst_79 [0] : vector<32x128xf32> to vector<128xf32>
    %149 = vector.shape_cast %148 : vector<128xf32> to vector<1x128xf32>
    %cst_80 = arith.constant 3.125000e-02 : f32
    %150 = vector.broadcast %cst_80 : f32 to vector<1x128xf32>
    %151 = arith.mulf %149, %150 : vector<1x128xf32>
    %cst_81 = arith.constant 9.99999974E-6 : f32
    %152 = vector.broadcast %cst_81 : f32 to vector<1x128xf32>
    %153 = arith.addf %151, %152 : vector<1x128xf32>
    %154 = math.rsqrt %153 : vector<1x128xf32>
    %155 = vector.extract_strided_slice %140 {offsets = [0, 0], sizes = [1, 128], strides = [1, 1]} : vector<2x128xf32> to vector<1x128xf32>
    %156 = arith.mulf %154, %155 : vector<1x128xf32>
    %157 = vector.broadcast %156 : vector<1x128xf32> to vector<32x128xf32>
    %158 = arith.mulf %146, %157 : vector<32x128xf32>
    %159 = vector.extract_strided_slice %140 {offsets = [1, 0], sizes = [1, 128], strides = [1, 1]} : vector<2x128xf32> to vector<1x128xf32>
    %160 = vector.broadcast %159 : vector<1x128xf32> to vector<32x128xf32>
    %161 = arith.addf %158, %160 : vector<32x128xf32>
    %cst_82 = arith.constant 0.000000e+00 : f32
    %162 = vector.broadcast %cst_82 : f32 to vector<32x128xf32>
    %163 = arith.cmpf ogt, %161, %162 : vector<32x128xf32>
    %cst_83 = arith.constant 2.000000e-01 : f32
    %164 = vector.broadcast %cst_83 : f32 to vector<32x128xf32>
    %165 = arith.mulf %164, %161 : vector<32x128xf32>
    %166 = arith.select %163, %161, %165 : vector<32x128xi1>, vector<32x128xf32>
    %c0_84 = arith.constant 0 : index
    %c0_85 = arith.constant 0 : index
    %167 = vector.load %arg5[%c0_84, %c0_85] : memref<32x128xf32, #tpu.memory_space<vmem>>, vector<32x128xf32>
    tpu.vector_store %arg5[%c0_84, %c0_85], %166 {strides = array<i32>} : memref<32x128xf32, #tpu.memory_space<vmem>>, vector<32x128xf32>,
    return
  }
}

</mosaic_0001>

<llo_original>
// kernel: input_forward.1
$region0: #{input_forward.1}
  #allocation0 [shape = 'u32[]', space=smem, size = 0x4, offset = 0x4, fixed_abs, tag = 'smem constant byte address 0x4 - core index']
  #allocation1 [shape = 'u32[72,128]{1,0:T(1,128)}', space=vmem, size = 0x9000, scoped, tag = 'internal scratch']
  %s0 = inlined_call_operand.vmem [shape: f32[128,128], index: 0, kind: input, shape index: {}]
  %s1 = inlined_call_operand.vmem [shape: f32[128,128], index: 1, kind: input, shape index: {}]
  %s2 = inlined_call_operand.vmem [shape: bf16[16,32,128], index: 2, kind: input, shape index: {}]
  %s3 = inlined_call_operand.vmem [shape: f32[16,8,128], index: 3, kind: input, shape index: {}]
  %s4 = inlined_call_operand.vmem [shape: f32[2,128], index: 4, kind: input, shape index: {}]
  %s5 = inlined_call_operand.hbm [shape: f32[32,128], index: 5, kind: output, shape index: {}]
  %s6 = sld [smem:[#allocation0]]
  $region30: #{input_forward.1} parent=0
    _
  %s8 = ssub.s32 1, %s6
  %s9 = scalar_select 0, %s8, %s6
  $region1: #{input_forward.1} parent=0
    #allocation2 [shape = 'u8[16384]{0}', space=vmem, size = 0x4000, scoped, tag = 'output window, operand 0, single buffered']
    #allocation3 [shape = 's32[1]{0}', space=sflag, size = 0x4, scoped, tag = 'scoped memory for input_forward.1']
    %10 = vsyncpa [#allocation3], 0
    // Predicated region
    $region2: #{input_forward.1} parent=1 // pred_check
      _
    $region3: #{input_forward.1} parent=1 // pred_check_branch
      %12 = sbr.rel (0) target = $region5
    $region4: #{input_forward.1} parent=1 // pred_region
      _
    $region5: #{input_forward.1} parent=1 // pred_fallthru
      _
    // Predicated region
    $region6: #{input_forward.1} parent=1 // pred_check
      _
    $region7: #{input_forward.1} parent=1 // pred_check_branch
      %14 = sbr.rel (0) target = $region9
    $region8: #{input_forward.1} parent=1 // pred_region
      _
    $region9: #{input_forward.1} parent=1 // pred_fallthru
      _
    // Predicated region
    $region10: #{input_forward.1} parent=1 // pred_check
      _
    $region11: #{input_forward.1} parent=1 // pred_check_branch
      %16 = sbr.rel (0) target = $region13
    $region12: #{input_forward.1} parent=1 // pred_region
      _
    $region13: #{input_forward.1} parent=1 // pred_fallthru
      _
    // Predicated region
    $region14: #{input_forward.1} parent=1 // pred_check
      _
    $region15: #{input_forward.1} parent=1 // pred_check_branch
      %18 = sbr.rel (0) target = $region17
    $region16: #{input_forward.1} parent=1 // pred_region
      _
    $region17: #{input_forward.1} parent=1 // pred_fallthru
      _
    // Predicated region
    $region18: #{input_forward.1} parent=1 // pred_check
      _
    $region19: #{input_forward.1} parent=1 // pred_check_branch
      %20 = sbr.rel (0) target = $region21
    $region20: #{input_forward.1} parent=1 // pred_region
      _
    $region21: #{input_forward.1} parent=1 // pred_fallthru
      _
    %v21 = vld [vmem:[%s0] sm:$0xff]
    %v22 = vld [vmem:[%s0 + $0x8] sm:$0xff]
    %v23 = vld [vmem:[%s0 + $0x10] sm:$0xff]
    %v24 = vld [vmem:[%s0 + $0x18] sm:$0xff]
    %v25 = vld [vmem:[%s0 + $0x20] sm:$0xff]
    %v26 = vld [vmem:[%s0 + $0x28] sm:$0xff]
    %v27 = vld [vmem:[%s0 + $0x30] sm:$0xff]
    %v28 = vld [vmem:[%s0 + $0x38] sm:$0xff]
    %v29 = vld [vmem:[%s0 + $0x40] sm:$0xff]
    %v30 = vld [vmem:[%s0 + $0x48] sm:$0xff]
    %v31 = vld [vmem:[%s0 + $0x50] sm:$0xff]
    %v32 = vld [vmem:[%s0 + $0x58] sm:$0xff]
    %v33 = vld [vmem:[%s0 + $0x60] sm:$0xff]
    %v34 = vld [vmem:[%s0 + $0x68] sm:$0xff]
    %v35 = vld [vmem:[%s0 + $0x70] sm:$0xff]
    %v36 = vld [vmem:[%s0 + $0x78] sm:$0xff]
    %v37 = vld [vmem:[%s1] sm:$0xff]
    %v38 = vld [vmem:[%s1 + $0x8] sm:$0xff]
    %v39 = vld [vmem:[%s1 + $0x10] sm:$0xff]
    %v40 = vld [vmem:[%s1 + $0x18] sm:$0xff]
    %v41 = vld [vmem:[%s1 + $0x20] sm:$0xff]
    %v42 = vld [vmem:[%s1 + $0x28] sm:$0xff]
    %v43 = vld [vmem:[%s1 + $0x30] sm:$0xff]
    %v44 = vld [vmem:[%s1 + $0x38] sm:$0xff]
    %v45 = vld [vmem:[%s1 + $0x40] sm:$0xff]
    %v46 = vld [vmem:[%s1 + $0x48] sm:$0xff]
    %v47 = vld [vmem:[%s1 + $0x50] sm:$0xff]
    %v48 = vld [vmem:[%s1 + $0x58] sm:$0xff]
    %v49 = vld [vmem:[%s1 + $0x60] sm:$0xff]
    %v50 = vld [vmem:[%s1 + $0x68] sm:$0xff]
    %v51 = vld [vmem:[%s1 + $0x70] sm:$0xff]
    %v52 = vld [vmem:[%s1 + $0x78] sm:$0xff]
    %53 = vmatpush.msra.mxu0 %v52
    %54 = vmatpush.msra.mxu0 %v51
    %55 = vmatpush.msra.mxu0 %v50
    %56 = vmatpush.msra.mxu0 %v49
    %57 = vmatpush.msra.mxu0 %v48
    %58 = vmatpush.msra.mxu0 %v47
    %59 = vmatpush.msra.mxu0 %v46
    %60 = vmatpush.msra.mxu0 %v45
    %61 = vmatpush.msra.mxu0 %v44
    %62 = vmatpush.msra.mxu0 %v43
    %63 = vmatpush.msra.mxu0 %v42
    %64 = vmatpush.msra.mxu0 %v41
    %65 = vmatpush.msra.mxu0 %v40
    %66 = vmatpush.msra.mxu0 %v39
    %67 = vmatpush.msra.mxu0 %v38
    %68 = vmatpush.msra.mxu0 %v37
    %69 = vmatmul.f32.gmra.mxu0 %v21
    %v70 = vpop.f32.mrf.mxu0
    %v71 = vadd.f32 0.0, %v70
    %72 = vmatmul.f32.gmra.mxu0 %v22
    %v73 = vpop.f32.mrf.mxu0
    %v74 = vadd.f32 0.0, %v73
    %75 = vmatmul.f32.gmra.mxu0 %v23
    %v76 = vpop.f32.mrf.mxu0
    %v77 = vadd.f32 0.0, %v76
    %78 = vmatmul.f32.gmra.mxu0 %v24
    %v79 = vpop.f32.mrf.mxu0
    %v80 = vadd.f32 0.0, %v79
    %81 = vmatmul.f32.gmra.mxu0 %v25
    %v82 = vpop.f32.mrf.mxu0
    %v83 = vadd.f32 0.0, %v82
    %84 = vmatmul.f32.gmra.mxu0 %v26
    %v85 = vpop.f32.mrf.mxu0
    %v86 = vadd.f32 0.0, %v85
    %87 = vmatmul.f32.gmra.mxu0 %v27
    %v88 = vpop.f32.mrf.mxu0
    %v89 = vadd.f32 0.0, %v88
    %90 = vmatmul.f32.gmra.mxu0 %v28
    %v91 = vpop.f32.mrf.mxu0
    %v92 = vadd.f32 0.0, %v91
    %93 = vmatmul.f32.gmra.mxu0 %v29
    %v94 = vpop.f32.mrf.mxu0
    %v95 = vadd.f32 0.0, %v94
    %96 = vmatmul.f32.gmra.mxu0 %v30
    %v97 = vpop.f32.mrf.mxu0
    %v98 = vadd.f32 0.0, %v97
    %99 = vmatmul.f32.gmra.mxu0 %v31
    %v100 = vpop.f32.mrf.mxu0
    %v101 = vadd.f32 0.0, %v100
    %102 = vmatmul.f32.gmra.mxu0 %v32
    %v103 = vpop.f32.mrf.mxu0
    %v104 = vadd.f32 0.0, %v103
    %105 = vmatmul.f32.gmra.mxu0 %v33
    %v106 = vpop.f32.mrf.mxu0
    %v107 = vadd.f32 0.0, %v106
    %108 = vmatmul.f32.gmra.mxu0 %v34
    %v109 = vpop.f32.mrf.mxu0
    %v110 = vadd.f32 0.0, %v109
    %111 = vmatmul.f32.gmra.mxu0 %v35
    %v112 = vpop.f32.mrf.mxu0
    %v113 = vadd.f32 0.0, %v112
    %114 = vmatmul.f32.gmra.mxu0 %v36
    %v115 = vpop.f32.mrf.mxu0
    %v116 = vadd.f32 0.0, %v115
    %117 = vdwg.mxu0
    %vm118 = vcmp.gt.f32.partialorder %v71, 0.0
    %vm119 = vcmp.gt.f32.partialorder %v74, 0.0
    %vm120 = vcmp.gt.f32.partialorder %v77, 0.0
    %vm121 = vcmp.gt.f32.partialorder %v80, 0.0
    %vm122 = vcmp.gt.f32.partialorder %v83, 0.0
    %vm123 = vcmp.gt.f32.partialorder %v86, 0.0
    %vm124 = vcmp.gt.f32.partialorder %v89, 0.0
    %vm125 = vcmp.gt.f32.partialorder %v92, 0.0
    %vm126 = vcmp.gt.f32.partialorder %v95, 0.0
    %vm127 = vcmp.gt.f32.partialorder %v98, 0.0
    %vm128 = vcmp.gt.f32.partialorder %v101, 0.0
    %vm129 = vcmp.gt.f32.partialorder %v104, 0.0
    %vm130 = vcmp.gt.f32.partialorder %v107, 0.0
    %vm131 = vcmp.gt.f32.partialorder %v110, 0.0
    %vm132 = vcmp.gt.f32.partialorder %v113, 0.0
    %vm133 = vcmp.gt.f32.partialorder %v116, 0.0
    %v134 = vmul.f32 %v71, 0.2
    %v135 = vmul.f32 %v74, 0.2
    %v136 = vmul.f32 %v77, 0.2
    %v137 = vmul.f32 %v80, 0.2
    %v138 = vmul.f32 %v83, 0.2
    %v139 = vmul.f32 %v86, 0.2
    %v140 = vmul.f32 %v89, 0.2
    %v141 = vmul.f32 %v92, 0.2
    %v142 = vmul.f32 %v95, 0.2
    %v143 = vmul.f32 %v98, 0.2
    %v144 = vmul.f32 %v101, 0.2
    %v145 = vmul.f32 %v104, 0.2
    %v146 = vmul.f32 %v107, 0.2
    %v147 = vmul.f32 %v110, 0.2
    %v148 = vmul.f32 %v113, 0.2
    %v149 = vmul.f32 %v116, 0.2
    %v150 = vsel %vm118, %v71, %v134
    %v151 = vsel %vm119, %v74, %v135
    %v152 = vsel %vm120, %v77, %v136
    %v153 = vsel %vm121, %v80, %v137
    %v154 = vsel %vm122, %v83, %v138
    %v155 = vsel %vm123, %v86, %v139
    %v156 = vsel %vm124, %v89, %v140
    %v157 = vsel %vm125, %v92, %v141
    %v158 = vsel %vm126, %v95, %v142
    %v159 = vsel %vm127, %v98, %v143
    %v160 = vsel %vm128, %v101, %v144
    %v161 = vsel %vm129, %v104, %v145
    %v162 = vsel %vm130, %v107, %v146
    %v163 = vsel %vm131, %v110, %v147
    %v164 = vsel %vm132, %v113, %v148
    %v165 = vsel %vm133, %v116, %v149
    %v166 = vld [vmem:[%s3] sm:$0xff]
    %v167 = vld [vmem:[%s3 + $0x8] sm:$0xff]
    %v168 = vld [vmem:[%s3 + $0x10] sm:$0xff]
    %v169 = vld [vmem:[%s3 + $0x18] sm:$0xff]
    %v170 = vld [vmem:[%s3 + $0x20] sm:$0xff]
    %v171 = vld [vmem:[%s3 + $0x28] sm:$0xff]
    %v172 = vld [vmem:[%s3 + $0x30] sm:$0xff]
    %v173 = vld [vmem:[%s3 + $0x38] sm:$0xff]
    %v174 = vld [vmem:[%s3 + $0x40] sm:$0xff]
    %v175 = vld [vmem:[%s3 + $0x48] sm:$0xff]
    %v176 = vld [vmem:[%s3 + $0x50] sm:$0xff]
    %v177 = vld [vmem:[%s3 + $0x58] sm:$0xff]
    %v178 = vld [vmem:[%s3 + $0x60] sm:$0xff]
    %v179 = vld [vmem:[%s3 + $0x68] sm:$0xff]
    %v180 = vld [vmem:[%s3 + $0x70] sm:$0xff]
    %v181 = vld [vmem:[%s3 + $0x78] sm:$0xff]
    %v182 = vld [vmem:[%s2] sm:$0xf]
    %v183 = vld [vmem:[%s2 + $0x4] sm:$0xf]
    %v184 = vld [vmem:[%s2 + $0x8] sm:$0xf]
    %v185 = vld [vmem:[%s2 + $0xc] sm:$0xf]
    %v186 = vunpack.c.l.bf16 %v182
    %v187 = vunpack.c.l.bf16 %v183
    %v188 = vunpack.c.l.bf16 %v184
    %v189 = vunpack.c.l.bf16 %v185
    %190 = vmatpush.msra.mxu0 %v165
    %191 = vmatpush.msra.mxu0 %v164
    %192 = vmatpush.msra.mxu0 %v163
    %193 = vmatpush.msra.mxu0 %v162
    %194 = vmatpush.msra.mxu0 %v161
    %195 = vmatpush.msra.mxu0 %v160
    %196 = vmatpush.msra.mxu0 %v159
    %197 = vmatpush.msra.mxu0 %v158
    %198 = vmatpush.msra.mxu0 %v157
    %199 = vmatpush.msra.mxu0 %v156
    %200 = vmatpush.msra.mxu0 %v155
    %201 = vmatpush.msra.mxu0 %v154
    %202 = vmatpush.msra.mxu0 %v153
    %203 = vmatpush.msra.mxu0 %v152
    %204 = vmatpush.msra.mxu0 %v151
    %205 = vmatpush.msra.mxu0 %v150
    %206 = vmatmul.f32.gmra.mxu0 %v186
    %v207 = vpop.f32.mrf.mxu0
    %v208 = vadd.f32 0.0, %v207
    %209 = vmatmul.f32.gmra.mxu0 %v187
    %v210 = vpop.f32.mrf.mxu0
    %v211 = vadd.f32 0.0, %v210
    %212 = vmatmul.f32.gmra.mxu0 %v188
    %v213 = vpop.f32.mrf.mxu0
    %v214 = vadd.f32 0.0, %v213
    %215 = vmatmul.f32.gmra.mxu0 %v189
    %v216 = vpop.f32.mrf.mxu0
    %v217 = vadd.f32 0.0, %v216
    %218 = vdwg.mxu0
    %s219 = scalar_lea.vmem %s2, 16
    %v220 = vld [vmem:[%s219] sm:$0xf]
    %v221 = vld [vmem:[%s219 + $0x4] sm:$0xf]
    %v222 = vld [vmem:[%s219 + $0x8] sm:$0xf]
    %v223 = vld [vmem:[%s219 + $0xc] sm:$0xf]
    %v224 = vunpack.c.l.bf16 %v220
    %v225 = vunpack.c.l.bf16 %v221
    %v226 = vunpack.c.l.bf16 %v222
    %v227 = vunpack.c.l.bf16 %v223
    %228 = vmatpush.msra.mxu0 %v165
    %229 = vmatpush.msra.mxu0 %v164
    %230 = vmatpush.msra.mxu0 %v163
    %231 = vmatpush.msra.mxu0 %v162
    %232 = vmatpush.msra.mxu0 %v161
    %233 = vmatpush.msra.mxu0 %v160
    %234 = vmatpush.msra.mxu0 %v159
    %235 = vmatpush.msra.mxu0 %v158
    %236 = vmatpush.msra.mxu0 %v157
    %237 = vmatpush.msra.mxu0 %v156
    %238 = vmatpush.msra.mxu0 %v155
    %239 = vmatpush.msra.mxu0 %v154
    %240 = vmatpush.msra.mxu0 %v153
    %241 = vmatpush.msra.mxu0 %v152
    %242 = vmatpush.msra.mxu0 %v151
    %243 = vmatpush.msra.mxu0 %v150
    %244 = vmatmul.f32.gmra.mxu0 %v224
    %v245 = vpop.f32.mrf.mxu0
    %v246 = vadd.f32 0.0, %v245
    %247 = vmatmul.f32.gmra.mxu0 %v225
    %v248 = vpop.f32.mrf.mxu0
    %v249 = vadd.f32 0.0, %v248
    %250 = vmatmul.f32.gmra.mxu0 %v226
    %v251 = vpop.f32.mrf.mxu0
    %v252 = vadd.f32 0.0, %v251
    %253 = vmatmul.f32.gmra.mxu0 %v227
    %v254 = vpop.f32.mrf.mxu0
    %v255 = vadd.f32 0.0, %v254
    %256 = vdwg.mxu0
    %257 = vmatpush.msra.mxu0 0.0
    %258 = vmatpush.msra.mxu0 0.0
    %259 = vmatpush.msra.mxu0 0.0
    %260 = vmatpush.msra.mxu0 0.0
    %261 = vmatpush.msra.mxu0 0.0
    %262 = vmatpush.msra.mxu0 0.0
    %263 = vmatpush.msra.mxu0 0.0
    %264 = vmatpush.msra.mxu0 0.0
    %265 = vmatpush.msra.mxu0 0.0
    %266 = vmatpush.msra.mxu0 0.0
    %267 = vmatpush.msra.mxu0 0.0
    %268 = vmatpush.msra.mxu0 0.0
    %269 = vmatpush.msra.mxu0 0.0
    %270 = vmatpush.msra.mxu0 0.0
    %271 = vmatpush.msra.mxu0 0.0
    %272 = vmatpush.msra.mxu0 %v167
    %273 = vmatmul.f32.gmra.mxu0 %v246
    %v274 = vpop.f32.mrf.mxu0
    %v275 = vadd.f32 0.0, %v274
    %276 = vmatmul.f32.gmra.mxu0 %v249
    %v277 = vpop.f32.mrf.mxu0
    %v278 = vadd.f32 0.0, %v277
    %279 = vmatmul.f32.gmra.mxu0 %v252
    %v280 = vpop.f32.mrf.mxu0
    %v281 = vadd.f32 0.0, %v280
    %282 = vmatmul.f32.gmra.mxu0 %v255
    %v283 = vpop.f32.mrf.mxu0
    %v284 = vadd.f32 0.0, %v283
    %285 = vdwg.mxu0
    %286 = vmatpush.msra.mxu0 0.0
    %287 = vmatpush.msra.mxu0 0.0
    %288 = vmatpush.msra.mxu0 0.0
    %289 = vmatpush.msra.mxu0 0.0
    %290 = vmatpush.msra.mxu0 0.0
    %291 = vmatpush.msra.mxu0 0.0
    %292 = vmatpush.msra.mxu0 0.0
    %293 = vmatpush.msra.mxu0 0.0
    %294 = vmatpush.msra.mxu0 0.0
    %295 = vmatpush.msra.mxu0 0.0
    %296 = vmatpush.msra.mxu0 0.0
    %297 = vmatpush.msra.mxu0 0.0
    %298 = vmatpush.msra.mxu0 0.0
    %299 = vmatpush.msra.mxu0 0.0
    %300 = vmatpush.msra.mxu0 0.0
    %301 = vmatpush.msra.mxu0 %v166
    %302 = vmatmul.f32.gmra.mxu0 %v208
    %v303 = vpop.f32.mrf.mxu0
    %v304 = vadd.f32 %v275, %v303
    %305 = vmatmul.f32.gmra.mxu0 %v211
    %v306 = vpop.f32.mrf.mxu0
    %v307 = vadd.f32 %v278, %v306
    %308 = vmatmul.f32.gmra.mxu0 %v214
    %v309 = vpop.f32.mrf.mxu0
    %v310 = vadd.f32 %v281, %v309
    %311 = vmatmul.f32.gmra.mxu0 %v217
    %v312 = vpop.f32.mrf.mxu0
    %v313 = vadd.f32 %v284, %v312
    %314 = vdwg.mxu0
    %s315 = scalar_lea.vmem %s2, 32
    %v316 = vld [vmem:[%s315] sm:$0xf]
    %v317 = vld [vmem:[%s315 + $0x4] sm:$0xf]
    %v318 = vld [vmem:[%s315 + $0x8] sm:$0xf]
    %v319 = vld [vmem:[%s315 + $0xc] sm:$0xf]
    %v320 = vunpack.c.l.bf16 %v316
    %v321 = vunpack.c.l.bf16 %v317
    %v322 = vunpack.c.l.bf16 %v318
    %v323 = vunpack.c.l.bf16 %v319
    %324 = vmatpush.msra.mxu0 %v165
    %325 = vmatpush.msra.mxu0 %v164
    %326 = vmatpush.msra.mxu0 %v163
    %327 = vmatpush.msra.mxu0 %v162
    %328 = vmatpush.msra.mxu0 %v161
    %329 = vmatpush.msra.mxu0 %v160
    %330 = vmatpush.msra.mxu0 %v159
    %331 = vmatpush.msra.mxu0 %v158
    %332 = vmatpush.msra.mxu0 %v157
    %333 = vmatpush.msra.mxu0 %v156
    %334 = vmatpush.msra.mxu0 %v155
    %335 = vmatpush.msra.mxu0 %v154
    %336 = vmatpush.msra.mxu0 %v153
    %337 = vmatpush.msra.mxu0 %v152
    %338 = vmatpush.msra.mxu0 %v151
    %339 = vmatpush.msra.mxu0 %v150
    %340 = vmatmul.f32.gmra.mxu0 %v320
    %v341 = vpop.f32.mrf.mxu0
    %v342 = vadd.f32 0.0, %v341
    %343 = vmatmul.f32.gmra.mxu0 %v321
    %v344 = vpop.f32.mrf.mxu0
    %v345 = vadd.f32 0.0, %v344
    %346 = vmatmul.f32.gmra.mxu0 %v322
    %v347 = vpop.f32.mrf.mxu0
    %v348 = vadd.f32 0.0, %v347
    %349 = vmatmul.f32.gmra.mxu0 %v323
    %v350 = vpop.f32.mrf.mxu0
    %v351 = vadd.f32 0.0, %v350
    %352 = vdwg.mxu0
    %353 = vmatpush.msra.mxu0 0.0
    %354 = vmatpush.msra.mxu0 0.0
    %355 = vmatpush.msra.mxu0 0.0
    %356 = vmatpush.msra.mxu0 0.0
    %357 = vmatpush.msra.mxu0 0.0
    %358 = vmatpush.msra.mxu0 0.0
    %359 = vmatpush.msra.mxu0 0.0
    %360 = vmatpush.msra.mxu0 0.0
    %361 = vmatpush.msra.mxu0 0.0
    %362 = vmatpush.msra.mxu0 0.0
    %363 = vmatpush.msra.mxu0 0.0
    %364 = vmatpush.msra.mxu0 0.0
    %365 = vmatpush.msra.mxu0 0.0
    %366 = vmatpush.msra.mxu0 0.0
    %367 = vmatpush.msra.mxu0 0.0
    %368 = vmatpush.msra.mxu0 %v168
    %369 = vmatmul.f32.gmra.mxu0 %v342
    %v370 = vpop.f32.mrf.mxu0
    %v371 = vadd.f32 0.0, %v370
    %372 = vmatmul.f32.gmra.mxu0 %v345
    %v373 = vpop.f32.mrf.mxu0
    %v374 = vadd.f32 0.0, %v373
    %375 = vmatmul.f32.gmra.mxu0 %v348
    %v376 = vpop.f32.mrf.mxu0
    %v377 = vadd.f32 0.0, %v376
    %378 = vmatmul.f32.gmra.mxu0 %v351
    %v379 = vpop.f32.mrf.mxu0
    %v380 = vadd.f32 0.0, %v379
    %381 = vdwg.mxu0
    %v382 = vadd.f32 %v304, %v371
    %v383 = vadd.f32 %v307, %v374
    %v384 = vadd.f32 %v310, %v377
    %v385 = vadd.f32 %v313, %v380
    %s386 = scalar_lea.vmem %s2, 48
    %v387 = vld [vmem:[%s386] sm:$0xf]
    %v388 = vld [vmem:[%s386 + $0x4] sm:$0xf]
    %v389 = vld [vmem:[%s386 + $0x8] sm:$0xf]
    %v390 = vld [vmem:[%s386 + $0xc] sm:$0xf]
    %v391 = vunpack.c.l.bf16 %v387
    %v392 = vunpack.c.l.bf16 %v388
    %v393 = vunpack.c.l.bf16 %v389
    %v394 = vunpack.c.l.bf16 %v390
    %395 = vmatpush.msra.mxu0 %v165
    %396 = vmatpush.msra.mxu0 %v164
    %397 = vmatpush.msra.mxu0 %v163
    %398 = vmatpush.msra.mxu0 %v162
    %399 = vmatpush.msra.mxu0 %v161
    %400 = vmatpush.msra.mxu0 %v160
    %401 = vmatpush.msra.mxu0 %v159
    %402 = vmatpush.msra.mxu0 %v158
    %403 = vmatpush.msra.mxu0 %v157
    %404 = vmatpush.msra.mxu0 %v156
    %405 = vmatpush.msra.mxu0 %v155
    %406 = vmatpush.msra.mxu0 %v154
    %407 = vmatpush.msra.mxu0 %v153
    %408 = vmatpush.msra.mxu0 %v152
    %409 = vmatpush.msra.mxu0 %v151
    %410 = vmatpush.msra.mxu0 %v150
    %411 = vmatmul.f32.gmra.mxu0 %v391
    %v412 = vpop.f32.mrf.mxu0
    %v413 = vadd.f32 0.0, %v412
    %414 = vmatmul.f32.gmra.mxu0 %v392
    %v415 = vpop.f32.mrf.mxu0
    %v416 = vadd.f32 0.0, %v415
    %417 = vmatmul.f32.gmra.mxu0 %v393
    %v418 = vpop.f32.mrf.mxu0
    %v419 = vadd.f32 0.0, %v418
    %420 = vmatmul.f32.gmra.mxu0 %v394
    %v421 = vpop.f32.mrf.mxu0
    %v422 = vadd.f32 0.0, %v421
    %423 = vdwg.mxu0
    %424 = vmatpush.msra.mxu0 0.0
    %425 = vmatpush.msra.mxu0 0.0
    %426 = vmatpush.msra.mxu0 0.0
    %427 = vmatpush.msra.mxu0 0.0
    %428 = vmatpush.msra.mxu0 0.0
    %429 = vmatpush.msra.mxu0 0.0
    %430 = vmatpush.msra.mxu0 0.0
    %431 = vmatpush.msra.mxu0 0.0
    %432 = vmatpush.msra.mxu0 0.0
    %433 = vmatpush.msra.mxu0 0.0
    %434 = vmatpush.msra.mxu0 0.0
    %435 = vmatpush.msra.mxu0 0.0
    %436 = vmatpush.msra.mxu0 0.0
    %437 = vmatpush.msra.mxu0 0.0
    %438 = vmatpush.msra.mxu0 0.0
    %439 = vmatpush.msra.mxu0 %v169
    %440 = vmatmul.f32.gmra.mxu0 %v413
    %v441 = vpop.f32.mrf.mxu0
    %v442 = vadd.f32 0.0, %v441
    %443 = vmatmul.f32.gmra.mxu0 %v416
    %v444 = vpop.f32.mrf.mxu0
    %v445 = vadd.f32 0.0, %v444
    %446 = vmatmul.f32.gmra.mxu0 %v419
    %v447 = vpop.f32.mrf.mxu0
    %v448 = vadd.f32 0.0, %v447
    %449 = vmatmul.f32.gmra.mxu0 %v422
    %v450 = vpop.f32.mrf.mxu0
    %v451 = vadd.f32 0.0, %v450
    %452 = vdwg.mxu0
    %v453 = vadd.f32 %v382, %v442
    %v454 = vadd.f32 %v383, %v445
    %v455 = vadd.f32 %v384, %v448
    %v456 = vadd.f32 %v385, %v451
    %s457 = scalar_lea.vmem %s2, 64
    %v458 = vld [vmem:[%s457] sm:$0xf]
    %v459 = vld [vmem:[%s457 + $0x4] sm:$0xf]
    %v460 = vld [vmem:[%s457 + $0x8] sm:$0xf]
    %v461 = vld [vmem:[%s457 + $0xc] sm:$0xf]
    %v462 = vunpack.c.l.bf16 %v458
    %v463 = vunpack.c.l.bf16 %v459
    %v464 = vunpack.c.l.bf16 %v460
    %v465 = vunpack.c.l.bf16 %v461
    %466 = vmatpush.msra.mxu0 %v165
    %467 = vmatpush.msra.mxu0 %v164
    %468 = vmatpush.msra.mxu0 %v163
    %469 = vmatpush.msra.mxu0 %v162
    %470 = vmatpush.msra.mxu0 %v161
    %471 = vmatpush.msra.mxu0 %v160
    %472 = vmatpush.msra.mxu0 %v159
    %473 = vmatpush.msra.mxu0 %v158
    %474 = vmatpush.msra.mxu0 %v157
    %475 = vmatpush.msra.mxu0 %v156
    %476 = vmatpush.msra.mxu0 %v155
    %477 = vmatpush.msra.mxu0 %v154
    %478 = vmatpush.msra.mxu0 %v153
    %479 = vmatpush.msra.mxu0 %v152
    %480 = vmatpush.msra.mxu0 %v151
    %481 = vmatpush.msra.mxu0 %v150
    %482 = vmatmul.f32.gmra.mxu0 %v462
    %v483 = vpop.f32.mrf.mxu0
    %v484 = vadd.f32 0.0, %v483
    %485 = vmatmul.f32.gmra.mxu0 %v463
    %v486 = vpop.f32.mrf.mxu0
    %v487 = vadd.f32 0.0, %v486
    %488 = vmatmul.f32.gmra.mxu0 %v464
    %v489 = vpop.f32.mrf.mxu0
    %v490 = vadd.f32 0.0, %v489
    %491 = vmatmul.f32.gmra.mxu0 %v465
    %v492 = vpop.f32.mrf.mxu0
    %v493 = vadd.f32 0.0, %v492
    %494 = vdwg.mxu0
    %495 = vmatpush.msra.mxu0 0.0
    %496 = vmatpush.msra.mxu0 0.0
    %497 = vmatpush.msra.mxu0 0.0
    %498 = vmatpush.msra.mxu0 0.0
    %499 = vmatpush.msra.mxu0 0.0
    %500 = vmatpush.msra.mxu0 0.0
    %501 = vmatpush.msra.mxu0 0.0
    %502 = vmatpush.msra.mxu0 0.0
    %503 = vmatpush.msra.mxu0 0.0
    %504 = vmatpush.msra.mxu0 0.0
    %505 = vmatpush.msra.mxu0 0.0
    %506 = vmatpush.msra.mxu0 0.0
    %507 = vmatpush.msra.mxu0 0.0
    %508 = vmatpush.msra.mxu0 0.0
    %509 = vmatpush.msra.mxu0 0.0
    %510 = vmatpush.msra.mxu0 %v170
    %511 = vmatmul.f32.gmra.mxu0 %v484
    %v512 = vpop.f32.mrf.mxu0
    %v513 = vadd.f32 0.0, %v512
    %514 = vmatmul.f32.gmra.mxu0 %v487
    %v515 = vpop.f32.mrf.mxu0
    %v516 = vadd.f32 0.0, %v515
    %517 = vmatmul.f32.gmra.mxu0 %v490
    %v518 = vpop.f32.mrf.mxu0
    %v519 = vadd.f32 0.0, %v518
    %520 = vmatmul.f32.gmra.mxu0 %v493
    %v521 = vpop.f32.mrf.mxu0
    %v522 = vadd.f32 0.0, %v521
    %523 = vdwg.mxu0
    %v524 = vadd.f32 %v453, %v513
    %v525 = vadd.f32 %v454, %v516
    %v526 = vadd.f32 %v455, %v519
    %v527 = vadd.f32 %v456, %v522
    %s528 = scalar_lea.vmem %s2, 80
    %v529 = vld [vmem:[%s528] sm:$0xf]
    %v530 = vld [vmem:[%s528 + $0x4] sm:$0xf]
    %v531 = vld [vmem:[%s528 + $0x8] sm:$0xf]
    %v532 = vld [vmem:[%s528 + $0xc] sm:$0xf]
    %v533 = vunpack.c.l.bf16 %v529
    %v534 = vunpack.c.l.bf16 %v530
    %v535 = vunpack.c.l.bf16 %v531
    %v536 = vunpack.c.l.bf16 %v532
    %537 = vmatpush.msra.mxu0 %v165
    %538 = vmatpush.msra.mxu0 %v164
    %539 = vmatpush.msra.mxu0 %v163
    %540 = vmatpush.msra.mxu0 %v162
    %541 = vmatpush.msra.mxu0 %v161
    %542 = vmatpush.msra.mxu0 %v160
    %543 = vmatpush.msra.mxu0 %v159
    %544 = vmatpush.msra.mxu0 %v158
    %545 = vmatpush.msra.mxu0 %v157
    %546 = vmatpush.msra.mxu0 %v156
    %547 = vmatpush.msra.mxu0 %v155
    %548 = vmatpush.msra.mxu0 %v154
    %549 = vmatpush.msra.mxu0 %v153
    %550 = vmatpush.msra.mxu0 %v152
    %551 = vmatpush.msra.mxu0 %v151
    %552 = vmatpush.msra.mxu0 %v150
    %553 = vmatmul.f32.gmra.mxu0 %v533
    %v554 = vpop.f32.mrf.mxu0
    %v555 = vadd.f32 0.0, %v554
    %556 = vmatmul.f32.gmra.mxu0 %v534
    %v557 = vpop.f32.mrf.mxu0
    %v558 = vadd.f32 0.0, %v557
    %559 = vmatmul.f32.gmra.mxu0 %v535
    %v560 = vpop.f32.mrf.mxu0
    %v561 = vadd.f32 0.0, %v560
    %562 = vmatmul.f32.gmra.mxu0 %v536
    %v563 = vpop.f32.mrf.mxu0
    %v564 = vadd.f32 0.0, %v563
    %565 = vdwg.mxu0
    %566 = vmatpush.msra.mxu0 0.0
    %567 = vmatpush.msra.mxu0 0.0
    %568 = vmatpush.msra.mxu0 0.0
    %569 = vmatpush.msra.mxu0 0.0
    %570 = vmatpush.msra.mxu0 0.0
    %571 = vmatpush.msra.mxu0 0.0
    %572 = vmatpush.msra.mxu0 0.0
    %573 = vmatpush.msra.mxu0 0.0
    %574 = vmatpush.msra.mxu0 0.0
    %575 = vmatpush.msra.mxu0 0.0
    %576 = vmatpush.msra.mxu0 0.0
    %577 = vmatpush.msra.mxu0 0.0
    %578 = vmatpush.msra.mxu0 0.0
    %579 = vmatpush.msra.mxu0 0.0
    %580 = vmatpush.msra.mxu0 0.0
    %581 = vmatpush.msra.mxu0 %v171
    %582 = vmatmul.f32.gmra.mxu0 %v555
    %v583 = vpop.f32.mrf.mxu0
    %v584 = vadd.f32 0.0, %v583
    %585 = vmatmul.f32.gmra.mxu0 %v558
    %v586 = vpop.f32.mrf.mxu0
    %v587 = vadd.f32 0.0, %v586
    %588 = vmatmul.f32.gmra.mxu0 %v561
    %v589 = vpop.f32.mrf.mxu0
    %v590 = vadd.f32 0.0, %v589
    %591 = vmatmul.f32.gmra.mxu0 %v564
    %v592 = vpop.f32.mrf.mxu0
    %v593 = vadd.f32 0.0, %v592
    %594 = vdwg.mxu0
    %v595 = vadd.f32 %v524, %v584
    %v596 = vadd.f32 %v525, %v587
    %v597 = vadd.f32 %v526, %v590
    %v598 = vadd.f32 %v527, %v593
    %s599 = scalar_lea.vmem %s2, 96
    %v600 = vld [vmem:[%s599] sm:$0xf]
    %v601 = vld [vmem:[%s599 + $0x4] sm:$0xf]
    %v602 = vld [vmem:[%s599 + $0x8] sm:$0xf]
    %v603 = vld [vmem:[%s599 + $0xc] sm:$0xf]
    %v604 = vunpack.c.l.bf16 %v600
    %v605 = vunpack.c.l.bf16 %v601
    %v606 = vunpack.c.l.bf16 %v602
    %v607 = vunpack.c.l.bf16 %v603
    %608 = vmatpush.msra.mxu0 %v165
    %609 = vmatpush.msra.mxu0 %v164
    %610 = vmatpush.msra.mxu0 %v163
    %611 = vmatpush.msra.mxu0 %v162
    %612 = vmatpush.msra.mxu0 %v161
    %613 = vmatpush.msra.mxu0 %v160
    %614 = vmatpush.msra.mxu0 %v159
    %615 = vmatpush.msra.mxu0 %v158
    %616 = vmatpush.msra.mxu0 %v157
    %617 = vmatpush.msra.mxu0 %v156
    %618 = vmatpush.msra.mxu0 %v155
    %619 = vmatpush.msra.mxu0 %v154
    %620 = vmatpush.msra.mxu0 %v153
    %621 = vmatpush.msra.mxu0 %v152
    %622 = vmatpush.msra.mxu0 %v151
    %623 = vmatpush.msra.mxu0 %v150
    %624 = vmatmul.f32.gmra.mxu0 %v604
    %v625 = vpop.f32.mrf.mxu0
    %v626 = vadd.f32 0.0, %v625
    %627 = vmatmul.f32.gmra.mxu0 %v605
    %v628 = vpop.f32.mrf.mxu0
    %v629 = vadd.f32 0.0, %v628
    %630 = vmatmul.f32.gmra.mxu0 %v606
    %v631 = vpop.f32.mrf.mxu0
    %v632 = vadd.f32 0.0, %v631
    %633 = vmatmul.f32.gmra.mxu0 %v607
    %v634 = vpop.f32.mrf.mxu0
    %v635 = vadd.f32 0.0, %v634
    %636 = vdwg.mxu0
    %637 = vmatpush.msra.mxu0 0.0
    %638 = vmatpush.msra.mxu0 0.0
    %639 = vmatpush.msra.mxu0 0.0
    %640 = vmatpush.msra.mxu0 0.0
    %641 = vmatpush.msra.mxu0 0.0
    %642 = vmatpush.msra.mxu0 0.0
    %643 = vmatpush.msra.mxu0 0.0
    %644 = vmatpush.msra.mxu0 0.0
    %645 = vmatpush.msra.mxu0 0.0
    %646 = vmatpush.msra.mxu0 0.0
    %647 = vmatpush.msra.mxu0 0.0
    %648 = vmatpush.msra.mxu0 0.0
    %649 = vmatpush.msra.mxu0 0.0
    %650 = vmatpush.msra.mxu0 0.0
    %651 = vmatpush.msra.mxu0 0.0
    %652 = vmatpush.msra.mxu0 %v172
    %653 = vmatmul.f32.gmra.mxu0 %v626
    %v654 = vpop.f32.mrf.mxu0
    %v655 = vadd.f32 0.0, %v654
    %656 = vmatmul.f32.gmra.mxu0 %v629
    %v657 = vpop.f32.mrf.mxu0
    %v658 = vadd.f32 0.0, %v657
    %659 = vmatmul.f32.gmra.mxu0 %v632
    %v660 = vpop.f32.mrf.mxu0
    %v661 = vadd.f32 0.0, %v660
    %662 = vmatmul.f32.gmra.mxu0 %v635
    %v663 = vpop.f32.mrf.mxu0
    %v664 = vadd.f32 0.0, %v663
    %665 = vdwg.mxu0
    %v666 = vadd.f32 %v595, %v655
    %v667 = vadd.f32 %v596, %v658
    %v668 = vadd.f32 %v597, %v661
    %v669 = vadd.f32 %v598, %v664
    %s670 = scalar_lea.vmem %s2, 112
    %v671 = vld [vmem:[%s670] sm:$0xf]
    %v672 = vld [vmem:[%s670 + $0x4] sm:$0xf]
    %v673 = vld [vmem:[%s670 + $0x8] sm:$0xf]
    %v674 = vld [vmem:[%s670 + $0xc] sm:$0xf]
    %v675 = vunpack.c.l.bf16 %v671
    %v676 = vunpack.c.l.bf16 %v672
    %v677 = vunpack.c.l.bf16 %v673
    %v678 = vunpack.c.l.bf16 %v674
    %679 = vmatpush.msra.mxu0 %v165
    %680 = vmatpush.msra.mxu0 %v164
    %681 = vmatpush.msra.mxu0 %v163
    %682 = vmatpush.msra.mxu0 %v162
    %683 = vmatpush.msra.mxu0 %v161
    %684 = vmatpush.msra.mxu0 %v160
    %685 = vmatpush.msra.mxu0 %v159
    %686 = vmatpush.msra.mxu0 %v158
    %687 = vmatpush.msra.mxu0 %v157
    %688 = vmatpush.msra.mxu0 %v156
    %689 = vmatpush.msra.mxu0 %v155
    %690 = vmatpush.msra.mxu0 %v154
    %691 = vmatpush.msra.mxu0 %v153
    %692 = vmatpush.msra.mxu0 %v152
    %693 = vmatpush.msra.mxu0 %v151
    %694 = vmatpush.msra.mxu0 %v150
    %695 = vmatmul.f32.gmra.mxu0 %v675
    %v696 = vpop.f32.mrf.mxu0
    %v697 = vadd.f32 0.0, %v696
    %698 = vmatmul.f32.gmra.mxu0 %v676
    %v699 = vpop.f32.mrf.mxu0
    %v700 = vadd.f32 0.0, %v699
    %701 = vmatmul.f32.gmra.mxu0 %v677
    %v702 = vpop.f32.mrf.mxu0
    %v703 = vadd.f32 0.0, %v702
    %704 = vmatmul.f32.gmra.mxu0 %v678
    %v705 = vpop.f32.mrf.mxu0
    %v706 = vadd.f32 0.0, %v705
    %707 = vdwg.mxu0
    %708 = vmatpush.msra.mxu0 0.0
    %709 = vmatpush.msra.mxu0 0.0
    %710 = vmatpush.msra.mxu0 0.0
    %711 = vmatpush.msra.mxu0 0.0
    %712 = vmatpush.msra.mxu0 0.0
    %713 = vmatpush.msra.mxu0 0.0
    %714 = vmatpush.msra.mxu0 0.0
    %715 = vmatpush.msra.mxu0 0.0
    %716 = vmatpush.msra.mxu0 0.0
    %717 = vmatpush.msra.mxu0 0.0
    %718 = vmatpush.msra.mxu0 0.0
    %719 = vmatpush.msra.mxu0 0.0
    %720 = vmatpush.msra.mxu0 0.0
    %721 = vmatpush.msra.mxu0 0.0
    %722 = vmatpush.msra.mxu0 0.0
    %723 = vmatpush.msra.mxu0 %v173
    %724 = vmatmul.f32.gmra.mxu0 %v697
    %v725 = vpop.f32.mrf.mxu0
    %v726 = vadd.f32 0.0, %v725
    %727 = vmatmul.f32.gmra.mxu0 %v700
    %v728 = vpop.f32.mrf.mxu0
    %v729 = vadd.f32 0.0, %v728
    %730 = vmatmul.f32.gmra.mxu0 %v703
    %v731 = vpop.f32.mrf.mxu0
    %v732 = vadd.f32 0.0, %v731
    %733 = vmatmul.f32.gmra.mxu0 %v706
    %v734 = vpop.f32.mrf.mxu0
    %v735 = vadd.f32 0.0, %v734
    %736 = vdwg.mxu0
    %v737 = vadd.f32 %v666, %v726
    %v738 = vadd.f32 %v667, %v729
    %v739 = vadd.f32 %v668, %v732
    %v740 = vadd.f32 %v669, %v735
    %s741 = scalar_lea.vmem %s2, 128
    %v742 = vld [vmem:[%s741] sm:$0xf]
    %v743 = vld [vmem:[%s741 + $0x4] sm:$0xf]
    %v744 = vld [vmem:[%s741 + $0x8] sm:$0xf]
    %v745 = vld [vmem:[%s741 + $0xc] sm:$0xf]
    %v746 = vunpack.c.l.bf16 %v742
    %v747 = vunpack.c.l.bf16 %v743
    %v748 = vunpack.c.l.bf16 %v744
    %v749 = vunpack.c.l.bf16 %v745
    %750 = vmatpush.msra.mxu0 %v165
    %751 = vmatpush.msra.mxu0 %v164
    %752 = vmatpush.msra.mxu0 %v163
    %753 = vmatpush.msra.mxu0 %v162
    %754 = vmatpush.msra.mxu0 %v161
    %755 = vmatpush.msra.mxu0 %v160
    %756 = vmatpush.msra.mxu0 %v159
    %757 = vmatpush.msra.mxu0 %v158
    %758 = vmatpush.msra.mxu0 %v157
    %759 = vmatpush.msra.mxu0 %v156
    %760 = vmatpush.msra.mxu0 %v155
    %761 = vmatpush.msra.mxu0 %v154
    %762 = vmatpush.msra.mxu0 %v153
    %763 = vmatpush.msra.mxu0 %v152
    %764 = vmatpush.msra.mxu0 %v151
    %765 = vmatpush.msra.mxu0 %v150
    %766 = vmatmul.f32.gmra.mxu0 %v746
    %v767 = vpop.f32.mrf.mxu0
    %v768 = vadd.f32 0.0, %v767
    %769 = vmatmul.f32.gmra.mxu0 %v747
    %v770 = vpop.f32.mrf.mxu0
    %v771 = vadd.f32 0.0, %v770
    %772 = vmatmul.f32.gmra.mxu0 %v748
    %v773 = vpop.f32.mrf.mxu0
    %v774 = vadd.f32 0.0, %v773
    %775 = vmatmul.f32.gmra.mxu0 %v749
    %v776 = vpop.f32.mrf.mxu0
    %v777 = vadd.f32 0.0, %v776
    %778 = vdwg.mxu0
    %779 = vmatpush.msra.mxu0 0.0
    %780 = vmatpush.msra.mxu0 0.0
    %781 = vmatpush.msra.mxu0 0.0
    %782 = vmatpush.msra.mxu0 0.0
    %783 = vmatpush.msra.mxu0 0.0
    %784 = vmatpush.msra.mxu0 0.0
    %785 = vmatpush.msra.mxu0 0.0
    %786 = vmatpush.msra.mxu0 0.0
    %787 = vmatpush.msra.mxu0 0.0
    %788 = vmatpush.msra.mxu0 0.0
    %789 = vmatpush.msra.mxu0 0.0
    %790 = vmatpush.msra.mxu0 0.0
    %791 = vmatpush.msra.mxu0 0.0
    %792 = vmatpush.msra.mxu0 0.0
    %793 = vmatpush.msra.mxu0 0.0
    %794 = vmatpush.msra.mxu0 %v174
    %795 = vmatmul.f32.gmra.mxu0 %v768
    %v796 = vpop.f32.mrf.mxu0
    %v797 = vadd.f32 0.0, %v796
    %798 = vmatmul.f32.gmra.mxu0 %v771
    %v799 = vpop.f32.mrf.mxu0
    %v800 = vadd.f32 0.0, %v799
    %801 = vmatmul.f32.gmra.mxu0 %v774
    %v802 = vpop.f32.mrf.mxu0
    %v803 = vadd.f32 0.0, %v802
    %804 = vmatmul.f32.gmra.mxu0 %v777
    %v805 = vpop.f32.mrf.mxu0
    %v806 = vadd.f32 0.0, %v805
    %807 = vdwg.mxu0
    %v808 = vadd.f32 %v737, %v797
    %v809 = vadd.f32 %v738, %v800
    %v810 = vadd.f32 %v739, %v803
    %v811 = vadd.f32 %v740, %v806
    %s812 = scalar_lea.vmem %s2, 144
    %v813 = vld [vmem:[%s812] sm:$0xf]
    %v814 = vld [vmem:[%s812 + $0x4] sm:$0xf]
    %v815 = vld [vmem:[%s812 + $0x8] sm:$0xf]
    %v816 = vld [vmem:[%s812 + $0xc] sm:$0xf]
    %v817 = vunpack.c.l.bf16 %v813
    %v818 = vunpack.c.l.bf16 %v814
    %v819 = vunpack.c.l.bf16 %v815
    %v820 = vunpack.c.l.bf16 %v816
    %821 = vmatpush.msra.mxu0 %v165
    %822 = vmatpush.msra.mxu0 %v164
    %823 = vmatpush.msra.mxu0 %v163
    %824 = vmatpush.msra.mxu0 %v162
    %825 = vmatpush.msra.mxu0 %v161
    %826 = vmatpush.msra.mxu0 %v160
    %827 = vmatpush.msra.mxu0 %v159
    %828 = vmatpush.msra.mxu0 %v158
    %829 = vmatpush.msra.mxu0 %v157
    %830 = vmatpush.msra.mxu0 %v156
    %831 = vmatpush.msra.mxu0 %v155
    %832 = vmatpush.msra.mxu0 %v154
    %833 = vmatpush.msra.mxu0 %v153
    %834 = vmatpush.msra.mxu0 %v152
    %835 = vmatpush.msra.mxu0 %v151
    %836 = vmatpush.msra.mxu0 %v150
    %837 = vmatmul.f32.gmra.mxu0 %v817
    %v838 = vpop.f32.mrf.mxu0
    %v839 = vadd.f32 0.0, %v838
    %840 = vmatmul.f32.gmra.mxu0 %v818
    %v841 = vpop.f32.mrf.mxu0
    %v842 = vadd.f32 0.0, %v841
    %843 = vmatmul.f32.gmra.mxu0 %v819
    %v844 = vpop.f32.mrf.mxu0
    %v845 = vadd.f32 0.0, %v844
    %846 = vmatmul.f32.gmra.mxu0 %v820
    %v847 = vpop.f32.mrf.mxu0
    %v848 = vadd.f32 0.0, %v847
    %849 = vdwg.mxu0
    %850 = vmatpush.msra.mxu0 0.0
    %851 = vmatpush.msra.mxu0 0.0
    %852 = vmatpush.msra.mxu0 0.0
    %853 = vmatpush.msra.mxu0 0.0
    %854 = vmatpush.msra.mxu0 0.0
    %855 = vmatpush.msra.mxu0 0.0
    %856 = vmatpush.msra.mxu0 0.0
    %857 = vmatpush.msra.mxu0 0.0
    %858 = vmatpush.msra.mxu0 0.0
    %859 = vmatpush.msra.mxu0 0.0
    %860 = vmatpush.msra.mxu0 0.0
    %861 = vmatpush.msra.mxu0 0.0
    %862 = vmatpush.msra.mxu0 0.0
    %863 = vmatpush.msra.mxu0 0.0
    %864 = vmatpush.msra.mxu0 0.0
    %865 = vmatpush.msra.mxu0 %v175
    %866 = vmatmul.f32.gmra.mxu0 %v839
    %v867 = vpop.f32.mrf.mxu0
    %v868 = vadd.f32 0.0, %v867
    %869 = vmatmul.f32.gmra.mxu0 %v842
    %v870 = vpop.f32.mrf.mxu0
    %v871 = vadd.f32 0.0, %v870
    %872 = vmatmul.f32.gmra.mxu0 %v845
    %v873 = vpop.f32.mrf.mxu0
    %v874 = vadd.f32 0.0, %v873
    %875 = vmatmul.f32.gmra.mxu0 %v848
    %v876 = vpop.f32.mrf.mxu0
    %v877 = vadd.f32 0.0, %v876
    %878 = vdwg.mxu0
    %v879 = vadd.f32 %v808, %v868
    %v880 = vadd.f32 %v809, %v871
    %v881 = vadd.f32 %v810, %v874
    %v882 = vadd.f32 %v811, %v877
    %s883 = scalar_lea.vmem %s2, 160
    %v884 = vld [vmem:[%s883] sm:$0xf]
    %v885 = vld [vmem:[%s883 + $0x4] sm:$0xf]
    %v886 = vld [vmem:[%s883 + $0x8] sm:$0xf]
    %v887 = vld [vmem:[%s883 + $0xc] sm:$0xf]
    %v888 = vunpack.c.l.bf16 %v884
    %v889 = vunpack.c.l.bf16 %v885
    %v890 = vunpack.c.l.bf16 %v886
    %v891 = vunpack.c.l.bf16 %v887
    %892 = vmatpush.msra.mxu0 %v165
    %893 = vmatpush.msra.mxu0 %v164
    %894 = vmatpush.msra.mxu0 %v163
    %895 = vmatpush.msra.mxu0 %v162
    %896 = vmatpush.msra.mxu0 %v161
    %897 = vmatpush.msra.mxu0 %v160
    %898 = vmatpush.msra.mxu0 %v159
    %899 = vmatpush.msra.mxu0 %v158
    %900 = vmatpush.msra.mxu0 %v157
    %901 = vmatpush.msra.mxu0 %v156
    %902 = vmatpush.msra.mxu0 %v155
    %903 = vmatpush.msra.mxu0 %v154
    %904 = vmatpush.msra.mxu0 %v153
    %905 = vmatpush.msra.mxu0 %v152
    %906 = vmatpush.msra.mxu0 %v151
    %907 = vmatpush.msra.mxu0 %v150
    %908 = vmatmul.f32.gmra.mxu0 %v888
    %v909 = vpop.f32.mrf.mxu0
    %v910 = vadd.f32 0.0, %v909
    %911 = vmatmul.f32.gmra.mxu0 %v889
    %v912 = vpop.f32.mrf.mxu0
    %v913 = vadd.f32 0.0, %v912
    %914 = vmatmul.f32.gmra.mxu0 %v890
    %v915 = vpop.f32.mrf.mxu0
    %v916 = vadd.f32 0.0, %v915
    %917 = vmatmul.f32.gmra.mxu0 %v891
    %v918 = vpop.f32.mrf.mxu0
    %v919 = vadd.f32 0.0, %v918
    %920 = vdwg.mxu0
    %921 = vmatpush.msra.mxu0 0.0
    %922 = vmatpush.msra.mxu0 0.0
    %923 = vmatpush.msra.mxu0 0.0
    %924 = vmatpush.msra.mxu0 0.0
    %925 = vmatpush.msra.mxu0 0.0
    %926 = vmatpush.msra.mxu0 0.0
    %927 = vmatpush.msra.mxu0 0.0
    %928 = vmatpush.msra.mxu0 0.0
    %929 = vmatpush.msra.mxu0 0.0
    %930 = vmatpush.msra.mxu0 0.0
    %931 = vmatpush.msra.mxu0 0.0
    %932 = vmatpush.msra.mxu0 0.0
    %933 = vmatpush.msra.mxu0 0.0
    %934 = vmatpush.msra.mxu0 0.0
    %935 = vmatpush.msra.mxu0 0.0
    %936 = vmatpush.msra.mxu0 %v176
    %937 = vmatmul.f32.gmra.mxu0 %v910
    %v938 = vpop.f32.mrf.mxu0
    %v939 = vadd.f32 0.0, %v938
    %940 = vmatmul.f32.gmra.mxu0 %v913
    %v941 = vpop.f32.mrf.mxu0
    %v942 = vadd.f32 0.0, %v941
    %943 = vmatmul.f32.gmra.mxu0 %v916
    %v944 = vpop.f32.mrf.mxu0
    %v945 = vadd.f32 0.0, %v944
    %946 = vmatmul.f32.gmra.mxu0 %v919
    %v947 = vpop.f32.mrf.mxu0
    %v948 = vadd.f32 0.0, %v947
    %949 = vdwg.mxu0
    %v950 = vadd.f32 %v879, %v939
    %v951 = vadd.f32 %v880, %v942
    %v952 = vadd.f32 %v881, %v945
    %v953 = vadd.f32 %v882, %v948
    %s954 = scalar_lea.vmem %s2, 176
    %v955 = vld [vmem:[%s954] sm:$0xf]
    %v956 = vld [vmem:[%s954 + $0x4] sm:$0xf]
    %v957 = vld [vmem:[%s954 + $0x8] sm:$0xf]
    %v958 = vld [vmem:[%s954 + $0xc] sm:$0xf]
    %v959 = vunpack.c.l.bf16 %v955
    %v960 = vunpack.c.l.bf16 %v956
    %v961 = vunpack.c.l.bf16 %v957
    %v962 = vunpack.c.l.bf16 %v958
    %963 = vmatpush.msra.mxu0 %v165
    %964 = vmatpush.msra.mxu0 %v164
    %965 = vmatpush.msra.mxu0 %v163
    %966 = vmatpush.msra.mxu0 %v162
    %967 = vmatpush.msra.mxu0 %v161
    %968 = vmatpush.msra.mxu0 %v160
    %969 = vmatpush.msra.mxu0 %v159
    %970 = vmatpush.msra.mxu0 %v158
    %971 = vmatpush.msra.mxu0 %v157
    %972 = vmatpush.msra.mxu0 %v156
    %973 = vmatpush.msra.mxu0 %v155
    %974 = vmatpush.msra.mxu0 %v154
    %975 = vmatpush.msra.mxu0 %v153
    %976 = vmatpush.msra.mxu0 %v152
    %977 = vmatpush.msra.mxu0 %v151
    %978 = vmatpush.msra.mxu0 %v150
    %979 = vmatmul.f32.gmra.mxu0 %v959
    %v980 = vpop.f32.mrf.mxu0
    %v981 = vadd.f32 0.0, %v980
    %982 = vmatmul.f32.gmra.mxu0 %v960
    %v983 = vpop.f32.mrf.mxu0
    %v984 = vadd.f32 0.0, %v983
    %985 = vmatmul.f32.gmra.mxu0 %v961
    %v986 = vpop.f32.mrf.mxu0
    %v987 = vadd.f32 0.0, %v986
    %988 = vmatmul.f32.gmra.mxu0 %v962
    %v989 = vpop.f32.mrf.mxu0
    %v990 = vadd.f32 0.0, %v989
    %991 = vdwg.mxu0
    %992 = vmatpush.msra.mxu0 0.0
    %993 = vmatpush.msra.mxu0 0.0
    %994 = vmatpush.msra.mxu0 0.0
    %995 = vmatpush.msra.mxu0 0.0
    %996 = vmatpush.msra.mxu0 0.0
    %997 = vmatpush.msra.mxu0 0.0
    %998 = vmatpush.msra.mxu0 0.0
    %999 = vmatpush.msra.mxu0 0.0
    %1000 = vmatpush.msra.mxu0 0.0
    %1001 = vmatpush.msra.mxu0 0.0
    %1002 = vmatpush.msra.mxu0 0.0
    %1003 = vmatpush.msra.mxu0 0.0
    %1004 = vmatpush.msra.mxu0 0.0
    %1005 = vmatpush.msra.mxu0 0.0
    %1006 = vmatpush.msra.mxu0 0.0
    %1007 = vmatpush.msra.mxu0 %v177
    %1008 = vmatmul.f32.gmra.mxu0 %v981
    %v1009 = vpop.f32.mrf.mxu0
    %v1010 = vadd.f32 0.0, %v1009
    %1011 = vmatmul.f32.gmra.mxu0 %v984
    %v1012 = vpop.f32.mrf.mxu0
    %v1013 = vadd.f32 0.0, %v1012
    %1014 = vmatmul.f32.gmra.mxu0 %v987
    %v1015 = vpop.f32.mrf.mxu0
    %v1016 = vadd.f32 0.0, %v1015
    %1017 = vmatmul.f32.gmra.mxu0 %v990
    %v1018 = vpop.f32.mrf.mxu0
    %v1019 = vadd.f32 0.0, %v1018
    %1020 = vdwg.mxu0
    %v1021 = vadd.f32 %v950, %v1010
    %v1022 = vadd.f32 %v951, %v1013
    %v1023 = vadd.f32 %v952, %v1016
    %v1024 = vadd.f32 %v953, %v1019
    %s1025 = scalar_lea.vmem %s2, 192
    %v1026 = vld [vmem:[%s1025] sm:$0xf]
    %v1027 = vld [vmem:[%s1025 + $0x4] sm:$0xf]
    %v1028 = vld [vmem:[%s1025 + $0x8] sm:$0xf]
    %v1029 = vld [vmem:[%s1025 + $0xc] sm:$0xf]
    %v1030 = vunpack.c.l.bf16 %v1026
    %v1031 = vunpack.c.l.bf16 %v1027
    %v1032 = vunpack.c.l.bf16 %v1028
    %v1033 = vunpack.c.l.bf16 %v1029
    %1034 = vmatpush.msra.mxu0 %v165
    %1035 = vmatpush.msra.mxu0 %v164
    %1036 = vmatpush.msra.mxu0 %v163
    %1037 = vmatpush.msra.mxu0 %v162
    %1038 = vmatpush.msra.mxu0 %v161
    %1039 = vmatpush.msra.mxu0 %v160
    %1040 = vmatpush.msra.mxu0 %v159
    %1041 = vmatpush.msra.mxu0 %v158
    %1042 = vmatpush.msra.mxu0 %v157
    %1043 = vmatpush.msra.mxu0 %v156
    %1044 = vmatpush.msra.mxu0 %v155
    %1045 = vmatpush.msra.mxu0 %v154
    %1046 = vmatpush.msra.mxu0 %v153
    %1047 = vmatpush.msra.mxu0 %v152
    %1048 = vmatpush.msra.mxu0 %v151
    %1049 = vmatpush.msra.mxu0 %v150
    %1050 = vmatmul.f32.gmra.mxu0 %v1030
    %v1051 = vpop.f32.mrf.mxu0
    %v1052 = vadd.f32 0.0, %v1051
    %1053 = vmatmul.f32.gmra.mxu0 %v1031
    %v1054 = vpop.f32.mrf.mxu0
    %v1055 = vadd.f32 0.0, %v1054
    %1056 = vmatmul.f32.gmra.mxu0 %v1032
    %v1057 = vpop.f32.mrf.mxu0
    %v1058 = vadd.f32 0.0, %v1057
    %1059 = vmatmul.f32.gmra.mxu0 %v1033
    %v1060 = vpop.f32.mrf.mxu0
    %v1061 = vadd.f32 0.0, %v1060
    %1062 = vdwg.mxu0
    %1063 = vmatpush.msra.mxu0 0.0
    %1064 = vmatpush.msra.mxu0 0.0
    %1065 = vmatpush.msra.mxu0 0.0
    %1066 = vmatpush.msra.mxu0 0.0
    %1067 = vmatpush.msra.mxu0 0.0
    %1068 = vmatpush.msra.mxu0 0.0
    %1069 = vmatpush.msra.mxu0 0.0
    %1070 = vmatpush.msra.mxu0 0.0
    %1071 = vmatpush.msra.mxu0 0.0
    %1072 = vmatpush.msra.mxu0 0.0
    %1073 = vmatpush.msra.mxu0 0.0
    %1074 = vmatpush.msra.mxu0 0.0
    %1075 = vmatpush.msra.mxu0 0.0
    %1076 = vmatpush.msra.mxu0 0.0
    %1077 = vmatpush.msra.mxu0 0.0
    %1078 = vmatpush.msra.mxu0 %v178
    %1079 = vmatmul.f32.gmra.mxu0 %v1052
    %v1080 = vpop.f32.mrf.mxu0
    %v1081 = vadd.f32 0.0, %v1080
    %1082 = vmatmul.f32.gmra.mxu0 %v1055
    %v1083 = vpop.f32.mrf.mxu0
    %v1084 = vadd.f32 0.0, %v1083
    %1085 = vmatmul.f32.gmra.mxu0 %v1058
    %v1086 = vpop.f32.mrf.mxu0
    %v1087 = vadd.f32 0.0, %v1086
    %1088 = vmatmul.f32.gmra.mxu0 %v1061
    %v1089 = vpop.f32.mrf.mxu0
    %v1090 = vadd.f32 0.0, %v1089
    %1091 = vdwg.mxu0
    %v1092 = vadd.f32 %v1021, %v1081
    %v1093 = vadd.f32 %v1022, %v1084
    %v1094 = vadd.f32 %v1023, %v1087
    %v1095 = vadd.f32 %v1024, %v1090
    %s1096 = scalar_lea.vmem %s2, 208
    %v1097 = vld [vmem:[%s1096] sm:$0xf]
    %v1098 = vld [vmem:[%s1096 + $0x4] sm:$0xf]
    %v1099 = vld [vmem:[%s1096 + $0x8] sm:$0xf]
    %v1100 = vld [vmem:[%s1096 + $0xc] sm:$0xf]
    %v1101 = vunpack.c.l.bf16 %v1097
    %v1102 = vunpack.c.l.bf16 %v1098
    %v1103 = vunpack.c.l.bf16 %v1099
    %v1104 = vunpack.c.l.bf16 %v1100
    %1105 = vmatpush.msra.mxu0 %v165
    %1106 = vmatpush.msra.mxu0 %v164
    %1107 = vmatpush.msra.mxu0 %v163
    %1108 = vmatpush.msra.mxu0 %v162
    %1109 = vmatpush.msra.mxu0 %v161
    %1110 = vmatpush.msra.mxu0 %v160
    %1111 = vmatpush.msra.mxu0 %v159
    %1112 = vmatpush.msra.mxu0 %v158
    %1113 = vmatpush.msra.mxu0 %v157
    %1114 = vmatpush.msra.mxu0 %v156
    %1115 = vmatpush.msra.mxu0 %v155
    %1116 = vmatpush.msra.mxu0 %v154
    %1117 = vmatpush.msra.mxu0 %v153
    %1118 = vmatpush.msra.mxu0 %v152
    %1119 = vmatpush.msra.mxu0 %v151
    %1120 = vmatpush.msra.mxu0 %v150
    %1121 = vmatmul.f32.gmra.mxu0 %v1101
    %v1122 = vpop.f32.mrf.mxu0
    %v1123 = vadd.f32 0.0, %v1122
    %1124 = vmatmul.f32.gmra.mxu0 %v1102
    %v1125 = vpop.f32.mrf.mxu0
    %v1126 = vadd.f32 0.0, %v1125
    %1127 = vmatmul.f32.gmra.mxu0 %v1103
    %v1128 = vpop.f32.mrf.mxu0
    %v1129 = vadd.f32 0.0, %v1128
    %1130 = vmatmul.f32.gmra.mxu0 %v1104
    %v1131 = vpop.f32.mrf.mxu0
    %v1132 = vadd.f32 0.0, %v1131
    %1133 = vdwg.mxu0
    %1134 = vmatpush.msra.mxu0 0.0
    %1135 = vmatpush.msra.mxu0 0.0
    %1136 = vmatpush.msra.mxu0 0.0
    %1137 = vmatpush.msra.mxu0 0.0
    %1138 = vmatpush.msra.mxu0 0.0
    %1139 = vmatpush.msra.mxu0 0.0
    %1140 = vmatpush.msra.mxu0 0.0
    %1141 = vmatpush.msra.mxu0 0.0
    %1142 = vmatpush.msra.mxu0 0.0
    %1143 = vmatpush.msra.mxu0 0.0
    %1144 = vmatpush.msra.mxu0 0.0
    %1145 = vmatpush.msra.mxu0 0.0
    %1146 = vmatpush.msra.mxu0 0.0
    %1147 = vmatpush.msra.mxu0 0.0
    %1148 = vmatpush.msra.mxu0 0.0
    %1149 = vmatpush.msra.mxu0 %v179
    %1150 = vmatmul.f32.gmra.mxu0 %v1123
    %v1151 = vpop.f32.mrf.mxu0
    %v1152 = vadd.f32 0.0, %v1151
    %1153 = vmatmul.f32.gmra.mxu0 %v1126
    %v1154 = vpop.f32.mrf.mxu0
    %v1155 = vadd.f32 0.0, %v1154
    %1156 = vmatmul.f32.gmra.mxu0 %v1129
    %v1157 = vpop.f32.mrf.mxu0
    %v1158 = vadd.f32 0.0, %v1157
    %1159 = vmatmul.f32.gmra.mxu0 %v1132
    %v1160 = vpop.f32.mrf.mxu0
    %v1161 = vadd.f32 0.0, %v1160
    %1162 = vdwg.mxu0
    %v1163 = vadd.f32 %v1092, %v1152
    %v1164 = vadd.f32 %v1093, %v1155
    %v1165 = vadd.f32 %v1094, %v1158
    %v1166 = vadd.f32 %v1095, %v1161
    %s1167 = scalar_lea.vmem %s2, 224
    %v1168 = vld [vmem:[%s1167] sm:$0xf]
    %v1169 = vld [vmem:[%s1167 + $0x4] sm:$0xf]
    %v1170 = vld [vmem:[%s1167 + $0x8] sm:$0xf]
    %v1171 = vld [vmem:[%s1167 + $0xc] sm:$0xf]
    %v1172 = vunpack.c.l.bf16 %v1168
    %v1173 = vunpack.c.l.bf16 %v1169
    %v1174 = vunpack.c.l.bf16 %v1170
    %v1175 = vunpack.c.l.bf16 %v1171
    %1176 = vmatpush.msra.mxu0 %v165
    %1177 = vmatpush.msra.mxu0 %v164
    %1178 = vmatpush.msra.mxu0 %v163
    %1179 = vmatpush.msra.mxu0 %v162
    %1180 = vmatpush.msra.mxu0 %v161
    %1181 = vmatpush.msra.mxu0 %v160
    %1182 = vmatpush.msra.mxu0 %v159
    %1183 = vmatpush.msra.mxu0 %v158
    %1184 = vmatpush.msra.mxu0 %v157
    %1185 = vmatpush.msra.mxu0 %v156
    %1186 = vmatpush.msra.mxu0 %v155
    %1187 = vmatpush.msra.mxu0 %v154
    %1188 = vmatpush.msra.mxu0 %v153
    %1189 = vmatpush.msra.mxu0 %v152
    %1190 = vmatpush.msra.mxu0 %v151
    %1191 = vmatpush.msra.mxu0 %v150
    %1192 = vmatmul.f32.gmra.mxu0 %v1172
    %v1193 = vpop.f32.mrf.mxu0
    %v1194 = vadd.f32 0.0, %v1193
    %1195 = vmatmul.f32.gmra.mxu0 %v1173
    %v1196 = vpop.f32.mrf.mxu0
    %v1197 = vadd.f32 0.0, %v1196
    %1198 = vmatmul.f32.gmra.mxu0 %v1174
    %v1199 = vpop.f32.mrf.mxu0
    %v1200 = vadd.f32 0.0, %v1199
    %1201 = vmatmul.f32.gmra.mxu0 %v1175
    %v1202 = vpop.f32.mrf.mxu0
    %v1203 = vadd.f32 0.0, %v1202
    %1204 = vdwg.mxu0
    %1205 = vmatpush.msra.mxu0 0.0
    %1206 = vmatpush.msra.mxu0 0.0
    %1207 = vmatpush.msra.mxu0 0.0
    %1208 = vmatpush.msra.mxu0 0.0
    %1209 = vmatpush.msra.mxu0 0.0
    %1210 = vmatpush.msra.mxu0 0.0
    %1211 = vmatpush.msra.mxu0 0.0
    %1212 = vmatpush.msra.mxu0 0.0
    %1213 = vmatpush.msra.mxu0 0.0
    %1214 = vmatpush.msra.mxu0 0.0
    %1215 = vmatpush.msra.mxu0 0.0
    %1216 = vmatpush.msra.mxu0 0.0
    %1217 = vmatpush.msra.mxu0 0.0
    %1218 = vmatpush.msra.mxu0 0.0
    %1219 = vmatpush.msra.mxu0 0.0
    %1220 = vmatpush.msra.mxu0 %v180
    %1221 = vmatmul.f32.gmra.mxu0 %v1194
    %v1222 = vpop.f32.mrf.mxu0
    %v1223 = vadd.f32 0.0, %v1222
    %1224 = vmatmul.f32.gmra.mxu0 %v1197
    %v1225 = vpop.f32.mrf.mxu0
    %v1226 = vadd.f32 0.0, %v1225
    %1227 = vmatmul.f32.gmra.mxu0 %v1200
    %v1228 = vpop.f32.mrf.mxu0
    %v1229 = vadd.f32 0.0, %v1228
    %1230 = vmatmul.f32.gmra.mxu0 %v1203
    %v1231 = vpop.f32.mrf.mxu0
    %v1232 = vadd.f32 0.0, %v1231
    %1233 = vdwg.mxu0
    %v1234 = vadd.f32 %v1163, %v1223
    %v1235 = vadd.f32 %v1164, %v1226
    %v1236 = vadd.f32 %v1165, %v1229
    %v1237 = vadd.f32 %v1166, %v1232
    %s1238 = scalar_lea.vmem %s2, 240
    %v1239 = vld [vmem:[%s1238] sm:$0xf]
    %v1240 = vld [vmem:[%s1238 + $0x4] sm:$0xf]
    %v1241 = vld [vmem:[%s1238 + $0x8] sm:$0xf]
    %v1242 = vld [vmem:[%s1238 + $0xc] sm:$0xf]
    %v1243 = vunpack.c.l.bf16 %v1239
    %v1244 = vunpack.c.l.bf16 %v1240
    %v1245 = vunpack.c.l.bf16 %v1241
    %v1246 = vunpack.c.l.bf16 %v1242
    %1247 = vmatpush.msra.mxu0 %v165
    %1248 = vmatpush.msra.mxu0 %v164
    %1249 = vmatpush.msra.mxu0 %v163
    %1250 = vmatpush.msra.mxu0 %v162
    %1251 = vmatpush.msra.mxu0 %v161
    %1252 = vmatpush.msra.mxu0 %v160
    %1253 = vmatpush.msra.mxu0 %v159
    %1254 = vmatpush.msra.mxu0 %v158
    %1255 = vmatpush.msra.mxu0 %v157
    %1256 = vmatpush.msra.mxu0 %v156
    %1257 = vmatpush.msra.mxu0 %v155
    %1258 = vmatpush.msra.mxu0 %v154
    %1259 = vmatpush.msra.mxu0 %v153
    %1260 = vmatpush.msra.mxu0 %v152
    %1261 = vmatpush.msra.mxu0 %v151
    %1262 = vmatpush.msra.mxu0 %v150
    %1263 = vmatmul.f32.gmra.mxu0 %v1243
    %v1264 = vpop.f32.mrf.mxu0
    %v1265 = vadd.f32 0.0, %v1264
    %1266 = vmatmul.f32.gmra.mxu0 %v1244
    %v1267 = vpop.f32.mrf.mxu0
    %v1268 = vadd.f32 0.0, %v1267
    %1269 = vmatmul.f32.gmra.mxu0 %v1245
    %v1270 = vpop.f32.mrf.mxu0
    %v1271 = vadd.f32 0.0, %v1270
    %1272 = vmatmul.f32.gmra.mxu0 %v1246
    %v1273 = vpop.f32.mrf.mxu0
    %v1274 = vadd.f32 0.0, %v1273
    %1275 = vdwg.mxu0
    %1276 = vmatpush.msra.mxu0 0.0
    %1277 = vmatpush.msra.mxu0 0.0
    %1278 = vmatpush.msra.mxu0 0.0
    %1279 = vmatpush.msra.mxu0 0.0
    %1280 = vmatpush.msra.mxu0 0.0
    %1281 = vmatpush.msra.mxu0 0.0
    %1282 = vmatpush.msra.mxu0 0.0
    %1283 = vmatpush.msra.mxu0 0.0
    %1284 = vmatpush.msra.mxu0 0.0
    %1285 = vmatpush.msra.mxu0 0.0
    %1286 = vmatpush.msra.mxu0 0.0
    %1287 = vmatpush.msra.mxu0 0.0
    %1288 = vmatpush.msra.mxu0 0.0
    %1289 = vmatpush.msra.mxu0 0.0
    %1290 = vmatpush.msra.mxu0 0.0
    %1291 = vmatpush.msra.mxu0 %v181
    %1292 = vmatmul.f32.gmra.mxu0 %v1265
    %v1293 = vpop.f32.mrf.mxu0
    %v1294 = vadd.f32 0.0, %v1293
    %1295 = vmatmul.f32.gmra.mxu0 %v1268
    %v1296 = vpop.f32.mrf.mxu0
    %v1297 = vadd.f32 0.0, %v1296
    %1298 = vmatmul.f32.gmra.mxu0 %v1271
    %v1299 = vpop.f32.mrf.mxu0
    %v1300 = vadd.f32 0.0, %v1299
    %1301 = vmatmul.f32.gmra.mxu0 %v1274
    %v1302 = vpop.f32.mrf.mxu0
    %v1303 = vadd.f32 0.0, %v1302
    %1304 = vdwg.mxu0
    %v1305 = vadd.f32 %v1234, %v1294
    %v1306 = vadd.f32 %v1235, %v1297
    %v1307 = vadd.f32 %v1236, %v1300
    %v1308 = vadd.f32 %v1237, %v1303
    %v1309 = vld [vmem:[%s4] sm:$0x3]
    %v1310 = vadd.f32 %v1305, %v1306
    %v1311 = vadd.f32 %v1310, %v1307
    %v1312 = vadd.f32 %v1311, %v1308
    %v1313 = vrot.slane %v1312, 4
    %v1314 = vadd.f32 %v1312, %v1313
    %v1315 = vrot.slane %v1314, 2
    %v1316 = vadd.f32 %v1314, %v1315
    %v1317 = vrot.slane %v1316, 1
    %v1318 = vadd.f32 %v1316, %v1317
    %v1319 = vmul.f32 %v1318, 0.03125
    %v1320 = vsub.f32 %v1305, %v1319
    %v1321 = vsub.f32 %v1306, %v1319
    %v1322 = vsub.f32 %v1307, %v1319
    %v1323 = vsub.f32 %v1308, %v1319
    %v1324 = vmul.f32 %v1320, %v1320
    %v1325 = vmul.f32 %v1321, %v1321
    %v1326 = vmul.f32 %v1322, %v1322
    %v1327 = vmul.f32 %v1323, %v1323
    %v1328 = vadd.f32 %v1324, %v1325
    %v1329 = vadd.f32 %v1328, %v1326
    %v1330 = vadd.f32 %v1329, %v1327
    %v1331 = vrot.slane %v1330, 4
    %v1332 = vadd.f32 %v1330, %v1331
    %v1333 = vrot.slane %v1332, 2
    %v1334 = vadd.f32 %v1332, %v1333
    %v1335 = vrot.slane %v1334, 1
    %v1336 = vadd.f32 %v1334, %v1335
    %v1337 = vmul.f32 %v1336, 0.03125
    %v1338 = vadd.f32 %v1337, 1e-05
    %v1339 = vrsqrt.pop %v1338
    %v1340 = vmul.f32 %v1339, %v1338
    %v1341 = vmul.f32 %v1340, %v1339
    %v1342 = vmul.f32 0.5, %v1341
    %v1343 = vsub.f32 1.5, %v1342
    %v1344 = vmul.f32 %v1339, %v1343
    %vm1345 = vweird.f32 %v1338
    %vm1346 = vweird.f32 %v1339
    %vm1347 = vmor %vm1345, %vm1346
    %v1348 = vsel %vm1347, %v1339, %v1344
    %v1349 = vmul.f32 %v1348, %v1309
    %v1350 = vperm.slane %v1349, 0
    %v1351 = vmul.f32 %v1320, %v1350
    %v1352 = vmul.f32 %v1321, %v1350
    %v1353 = vmul.f32 %v1322, %v1350
    %v1354 = vmul.f32 %v1323, %v1350
    %v1355 = vperm.slane %v1309, 1
    %v1356 = vadd.f32 %v1351, %v1355
    %v1357 = vadd.f32 %v1352, %v1355
    %v1358 = vadd.f32 %v1353, %v1355
    %v1359 = vadd.f32 %v1354, %v1355
    %vm1360 = vcmp.gt.f32.partialorder %v1356, 0.0
    %vm1361 = vcmp.gt.f32.partialorder %v1357, 0.0
    %vm1362 = vcmp.gt.f32.partialorder %v1358, 0.0
    %vm1363 = vcmp.gt.f32.partialorder %v1359, 0.0
    %v1364 = vmul.f32 %v1356, 0.2
    %v1365 = vmul.f32 %v1357, 0.2
    %v1366 = vmul.f32 %v1358, 0.2
    %v1367 = vmul.f32 %v1359, 0.2
    %v1368 = vsel %vm1360, %v1356, %v1364
    %v1369 = vsel %vm1361, %v1357, %v1365
    %v1370 = vsel %vm1362, %v1358, %v1366
    %v1371 = vsel %vm1363, %v1359, %v1367
    %1372 = vst [vmem:[#allocation2] sm:$0xff] %v1368
    %1373 = vst [vmem:[#allocation2 + $0x8] sm:$0xff] %v1369
    %1374 = vst [vmem:[#allocation2 + $0x10] sm:$0xff] %v1370
    %1375 = vst [vmem:[#allocation2 + $0x18] sm:$0xff] %v1371
    // Predicated region
    $region22: #{input_forward.1} parent=1 // pred_check
      _
    $region23: #{input_forward.1} parent=1 // pred_check_branch
      %1377 = sbr.rel (0) target = $region25
    $region24: #{input_forward.1} parent=1 // pred_region
      %1379 = vsyncadd [#allocation3], 0
      %s1380 = sshll.u32 [#allocation2], 4
      %s1381 = int_to_ptr.vmem [resolvable:$true] %s1380
      %s1382 = sshll.u32 %s5, 4
      %s1383 = int_to_ptr.hbm [resolvable:$true] %s1382
      %1388 = dma.vmem_to_hbm [thread:$0]  %s1381, 512, %s1383, [#allocation3], 128, 128, 8
    $region25: #{input_forward.1} parent=1 // pred_fallthru
      _
    // Predicated region
    $region26: #{input_forward.1} parent=1 // pred_check
      _
    $region27: #{input_forward.1} parent=1 // pred_check_branch
      %1390 = sbr.rel (0) target = $region29
    $region28: #{input_forward.1} parent=1 // pred_region
      %1392 = dma.done [#allocation3], 512
    $region29: #{input_forward.1} parent=1 // pred_fallthru
      _
    %1393 = vsyncpa [#allocation3], 1

</llo_original>
